<compile_context>
chip_gen: v7x
topology: tpu7x:2x2x1
jax: 0.10.0
libtpu: 0.0.40
codegen_flags: <defaults>
</compile_context>

<pallas_src>
import functools
import math

import jax
import jax.numpy as jnp
from jax.experimental import pallas as pl
from jax.experimental.pallas import tpu as pltpu

ETA = 1e-5  # Constants.eta in the pvae / hvae codebase


def _round_up(x, m):
    return ((x + m - 1) // m) * m


def _cdiv(a, b):
    return -(-a // b)


def _enc_linear_kernel(num_hidden_layers, d_lat, d_sig, head_pad, sp_lo, sp_hi, *refs):
    """Fused MLP encoder kernel for one (TM, d_in) batch tile.

    refs = (x, W1, b1, [W2, b2, ...], W_head, b_head, out)
      x      : (TM, d_in)            source dtype (cast to bf16 in-kernel)
      Wi     : (fan_in, hidden_pad)  bf16, resident (zero-padded lanes)
      bi     : (1, hidden_pad)       f32,  resident
      W_head : (hidden_pad, head_pad) bf16 — [Wmu | Ws | 0-pad], lane-dense
      b_head : (1, head_pad)          f32
      out    : (TM, head_pad)         f32 — [mu | sigma | 0-pad], lane-dense
    """
    x_ref = refs[0]
    hidden_refs = refs[1:1 + 2 * num_hidden_layers]
    whead_ref = refs[1 + 2 * num_hidden_layers]
    bhead_ref = refs[2 + 2 * num_hidden_layers]
    out_ref = refs[-1]

    # In-kernel cast: input arrives in its source dtype; MXU operands are bf16.
    h = x_ref[...].astype(jnp.bfloat16)
    for layer in range(num_hidden_layers):
        w = hidden_refs[2 * layer][...]
        b = hidden_refs[2 * layer + 1][...]
        z = jnp.dot(h, w, preferred_element_type=jnp.float32) + b
        h = jnp.maximum(z, 0.0).astype(jnp.bfloat16)  # ReLU, back to bf16 for MXU

    # Single fused head matmul (mu and sigma columns together, lane-dense).
    head = jnp.dot(h, whead_ref[...], preferred_element_type=jnp.float32) + bhead_ref[...]

    # Stable softplus, restricted to the lane group(s) [sp_lo, sp_hi) that
    # actually contain sigma columns (bounds EUP work regardless of d_lat).
    sub = head[:, sp_lo:sp_hi]
    sp = jnp.maximum(sub, 0.0) + jnp.log1p(jnp.exp(-jnp.abs(sub))) + ETA

    # (1, W) column mask row; jnp.where broadcasts it over the batch tile.
    col = jax.lax.broadcasted_iota(jnp.int32, (1, sp_hi - sp_lo), 1) + sp_lo
    is_sigma = (col >= d_lat) & (col < d_lat + d_sig)

    if sp_lo > 0:
        out_ref[:, :sp_lo] = head[:, :sp_lo].astype(out_ref.dtype)
    out_ref[:, sp_lo:sp_hi] = jnp.where(is_sigma, sp, sub).astype(out_ref.dtype)
    if sp_hi < head_pad:
        out_ref[:, sp_hi:] = head[:, sp_hi:].astype(out_ref.dtype)


class Manifold:
    """Minimal stand-in for the manifold object (only coord_dim is used by EncLinear)."""

    def __init__(self, coord_dim):
        self.coord_dim = coord_dim


class EncLinearPallas:
    def __init__(self, manifold, data_size, num_hidden_layers, hidden_dim,
                 prior_iso=False, key=None):
        assert num_hidden_layers >= 1
        self.manifold = manifold
        self.data_size = tuple(data_size)
        self.num_hidden_layers = num_hidden_layers
        self.hidden_dim = hidden_dim
        self.hidden_pad = _round_up(hidden_dim, 128)  # lane-dense MXU width

        d_in = math.prod(self.data_size)
        d_lat = manifold.coord_dim
        d_sig = manifold.coord_dim if not prior_iso else 1
        self.d_in = d_in
        self.d_lat = d_lat
        self.d_sig = d_sig
        self.head_pad = _round_up(d_lat + d_sig, 128)         # lane-dense head width
        self.sp_lo = (d_lat // 128) * 128                      # sigma lane-group start
        self.sp_hi = _round_up(d_lat + d_sig, 128)             # sigma lane-group end

        key = jax.random.PRNGKey(0) if key is None else key
        keys = jax.random.split(key, 2 * (num_hidden_layers + 2))

        def init_linear(kw, kb, fan_in, fan_out, pad_in, pad_out, col_off=0):
            # deterministic small init (Kaiming-uniform-ish scale), f32 master,
            # embedded in a zero-padded lane-dense canvas.
            bound = 1.0 / float(fan_in) ** 0.5
            w = jax.random.uniform(kw, (fan_in, fan_out), jnp.float32, -bound, bound)
            b = jax.random.uniform(kb, (1, fan_out), jnp.float32, -bound, bound)
            wp = jnp.zeros((pad_in, pad_out), jnp.float32)
            wp = wp.at[:fan_in, col_off:col_off + fan_out].set(w)
            bp = jnp.zeros((1, pad_out), jnp.float32)
            bp = bp.at[:, col_off:col_off + fan_out].set(b)
            return wp, bp

        # Hidden (Linear, ReLU) blocks: zero-padded to hidden_pad lanes; the
        # padded lanes stay exactly zero through ReLU, so real-lane results
        # match the unpadded module. Weights bf16 (MXU), biases f32.
        self.hidden_ws, self.hidden_bs = [], []
        fan_in, pad_in = d_in, d_in
        for i in range(num_hidden_layers):
            w, b = init_linear(keys[2 * i], keys[2 * i + 1],
                               fan_in, hidden_dim, pad_in, self.hidden_pad)
            self.hidden_ws.append(w.astype(jnp.bfloat16))
            self.hidden_bs.append(b)
            fan_in, pad_in = hidden_dim, self.hidden_pad

        # Head: fc21 (mu) and fc22 (sigma) fused into one lane-dense canvas.
        wmu, bmu = init_linear(keys[-4], keys[-3], hidden_dim, d_lat,
                               self.hidden_pad, self.head_pad, col_off=0)
        ws, bs = init_linear(keys[-2], keys[-1], hidden_dim, d_sig,
                             self.hidden_pad, self.head_pad, col_off=d_lat)
        self.head_w = (wmu + ws).astype(jnp.bfloat16)   # disjoint column ranges
        self.head_b = bmu + bs

        # Flat param list in kernel order.
        self.kernel_params = []
        for w, b in zip(self.hidden_ws, self.hidden_bs):
            self.kernel_params += [w, b]
        self.kernel_params += [self.head_w, self.head_b]

    def __call__(self, x):
        # flatten trailing data_size dims (e.g. NCHW -> (B, C*H*W)); no astype,
        # no row padding in the wrapper (cast is in-kernel, last tile is ragged).
        batch_shape = x.shape[:-len(self.data_size)]
        lead = math.prod(batch_shape) if batch_shape else 1
        x2d = x.reshape((lead, self.d_in))

        # Tiny batches only: pad rows up to one f32 sublane granule (8 rows).
        lead_rows = lead
        if lead_rows < 8:
            x2d = jnp.pad(x2d, ((0, 8 - lead_rows), (0, 0)))
            lead_rows = 8

        # Per-generation VMEM budget (v7x: 64 MiB/TC; v5e/v6e: 128 MiB) with
        # headroom for Mosaic internal scratch.
        try:
            vmem_cap = int(pltpu.get_tpu_info().vmem_capacity_bytes)
        except Exception:
            vmem_cap = 64 << 20  # conservative: v7x per-TensorCore
        budget = max(16 << 20, min(int(vmem_cap * 0.6), 100 << 20))
        tm_max = 1024 if vmem_cap >= (96 << 20) else 512

        # Row tile: aim for >= 2 grid programs so v7x's two TensorCores both
        # get work; ragged last block is clamped by Pallas (no jnp.pad, at most
        # tm-1 rows of dead compute).
        tm = min(tm_max, _round_up(_cdiv(lead_rows, 2), 8))

        x_itemsize = x.dtype.itemsize

        def nbytes(a):
            return int(a.size) * a.dtype.itemsize

        weight_bytes = sum(nbytes(p) for p in self.kernel_params)

        def vmem_needed(tm_):
            # weights single-buffered (Buffered(1)); x + out double-buffered.
            return (weight_bytes
                    + 2 * tm_ * (self.d_in * x_itemsize + self.head_pad * 4)
                    + (4 << 20))

        while tm > 8 and vmem_needed(tm) > budget:
            tm = max(8, _round_up(tm // 2, 8))
        if vmem_needed(tm) > budget:
            # TODO(synk): K-tile the first matmul (extra "arbitrary" grid axis +
            # f32 VMEM accumulator) when the resident weights alone blow VMEM.
            raise ValueError("EncLinearPallas: resident weights exceed VMEM budget")

        grid = (_cdiv(lead_rows, tm),)
        rows = grid[0] * tm

        # Cost estimate with real FLOPs / transcendentals / bytes.
        nh = self.num_hidden_layers
        flops = 2 * rows * (
            self.d_in * self.hidden_pad
            + (nh - 1) * self.hidden_pad * self.hidden_pad
            + self.hidden_pad * self.head_pad
        )
        transcendentals = 2 * rows * (self.sp_hi - self.sp_lo)  # exp + log1p
        bytes_accessed = (lead_rows * self.d_in * x_itemsize
                          + weight_bytes
                          + lead_rows * self.head_pad * 4)

        kernel = functools.partial(
            _enc_linear_kernel, nh, self.d_lat, self.d_sig,
            self.head_pad, self.sp_lo, self.sp_hi)

        def build(use_buffered):
            in_specs = [pl.BlockSpec((tm, self.d_in), lambda i: (i, 0))]
            for p in self.kernel_params:
                if use_buffered:
                    # Constant-index resident blocks: single VMEM buffer.
                    in_specs.append(pl.BlockSpec(p.shape, lambda i: (0, 0),
                                                 pipeline_mode=pl.Buffered(1)))
                else:
                    in_specs.append(pl.BlockSpec(p.shape, lambda i: (0, 0)))
            return pl.pallas_call(
                kernel,
                out_shape=jax.ShapeDtypeStruct((lead_rows, self.head_pad), jnp.float32),
                grid=grid,
                in_specs=in_specs,
                out_specs=pl.BlockSpec((tm, self.head_pad), lambda i: (i, 0)),
                compiler_params=pltpu.CompilerParams(
                    dimension_semantics=("parallel",),
                    vmem_limit_bytes=int(budget),
                ),
                cost_estimate=pl.CostEstimate(
                    flops=int(flops),
                    transcendentals=int(transcendentals),
                    bytes_accessed=int(bytes_accessed),
                ),
            )

        try:
            out = build(True)(x2d, *self.kernel_params)
        except Exception:
            # Fallback for jax versions where BlockSpec pipeline_mode /
            # Buffered(1) is not supported on the main pallas_call pipeline.
            out = build(False)(x2d, *self.kernel_params)

        mu = out[:lead, :self.d_lat].reshape(batch_shape + (self.d_lat,))
        sigma = out[:lead, self.d_lat:self.d_lat + self.d_sig].reshape(
            batch_shape + (self.d_sig,))
        return mu, sigma, self.manifold


def _reference_forward(enc, x):
    """Pure-JAX reference with the same bf16-MXU / f32-accumulate numerics."""
    batch_shape = x.shape[:-len(enc.data_size)]
    h = x.reshape(batch_shape + (-1,)).astype(jnp.bfloat16)
    for w, b in zip(enc.hidden_ws, enc.hidden_bs):
        z = jnp.dot(h, w, preferred_element_type=jnp.float32) + b
        h = jnp.maximum(z, 0.0).astype(jnp.bfloat16)
    head = jnp.dot(h, enc.head_w, preferred_element_type=jnp.float32) + enc.head_b
    mu = head[..., :enc.d_lat]
    s = head[..., enc.d_lat:enc.d_lat + enc.d_sig]
    sigma = jax.nn.softplus(s) + ETA
    return mu, sigma


if __name__ == "__main__":
    key = jax.random.PRNGKey(0)
    k_x, k_p = jax.random.split(key)

    # small shapes: batch=2, data_size=(4, 16, 16) -> flattened input dim 1024
    data_size = (4, 16, 16)
    batch = 2
    hidden_dim = 32
    num_hidden_layers = 2
    manifold = Manifold(coord_dim=8)

    x = jax.random.normal(k_x, (batch,) + data_size, dtype=jnp.float32)

    enc = EncLinearPallas(manifold, data_size, num_hidden_layers, hidden_dim,
                          prior_iso=False, key=k_p)

    mu, sigma, mani = enc(x)
    jax.block_until_ready((mu, sigma))

    mu_ref, sigma_ref = _reference_forward(enc, x)
    assert mu.shape == (batch, manifold.coord_dim)
    assert sigma.shape == (batch, manifold.coord_dim)
    assert jnp.allclose(mu, mu_ref, atol=1e-3, rtol=1e-3)
    assert jnp.allclose(sigma, sigma_ref, atol=1e-3, rtol=1e-3)
    assert mani is manifold

    print("KERNEL_OK")
</pallas_src>

<mosaic_0001>
module attributes {stable_mosaic.version = 11 : i64} {
  func.func @_enc_linear_kernel(%arg0: i32, %arg1: memref<8x1024xf32, #tpu.memory_space<vmem>>, %arg2: memref<1024x128xbf16, #tpu.memory_space<vmem>>, %arg3: memref<1x128xf32, #tpu.memory_space<vmem>>, %arg4: memref<128x128xbf16, #tpu.memory_space<vmem>>, %arg5: memref<1x128xf32, #tpu.memory_space<vmem>>, %arg6: memref<128x128xbf16, #tpu.memory_space<vmem>>, %arg7: memref<1x128xf32, #tpu.memory_space<vmem>>, %arg8: memref<8x128xf32, #tpu.memory_space<vmem>>) attributes {dimension_semantics = [#tpu.dimension_semantics<parallel>], iteration_bounds = array<i64: 1>, scalar_prefetch = 0 : i64, scratch_operands = 0 : i64, tpu.core_type = #tpu.core_type<tc>, window_params = [{transform_indices = @transform_0, window_bounds = array<i64: 8, 1024>}, {pipeline_mode = #tpu.pipeline_mode<synchronous>, transform_indices = @transform_1, window_bounds = array<i64: 1024, 128>}, {pipeline_mode = #tpu.pipeline_mode<synchronous>, transform_indices = @transform_2, window_bounds = array<i64: 1, 128>}, {pipeline_mode = #tpu.pipeline_mode<synchronous>, transform_indices = @transform_3, window_bounds = array<i64: 128, 128>}, {pipeline_mode = #tpu.pipeline_mode<synchronous>, transform_indices = @transform_4, window_bounds = array<i64: 1, 128>}, {pipeline_mode = #tpu.pipeline_mode<synchronous>, transform_indices = @transform_5, window_bounds = array<i64: 128, 128>}, {pipeline_mode = #tpu.pipeline_mode<synchronous>, transform_indices = @transform_6, window_bounds = array<i64: 1, 128>}, {transform_indices = @transform_7, window_bounds = array<i64: 8, 128>}]} {
    %c0 = arith.constant 0 : index
    %c0_0 = arith.constant 0 : index
    %0 = vector.load %arg1[%c0, %c0_0] : memref<8x1024xf32, #tpu.memory_space<vmem>>, vector<8x1024xf32>
    %1 = arith.truncf %0 : vector<8x1024xf32> to vector<8x1024xbf16>
    %c0_1 = arith.constant 0 : index
    %c0_2 = arith.constant 0 : index
    %2 = vector.load %arg2[%c0_1, %c0_2] : memref<1024x128xbf16, #tpu.memory_space<vmem>>, vector<1024x128xbf16>
    %c0_3 = arith.constant 0 : index
    %c0_4 = arith.constant 0 : index
    %3 = vector.load %arg3[%c0_3, %c0_4] : memref<1x128xf32, #tpu.memory_space<vmem>>, vector<1x128xf32>
    %cst = arith.constant dense<0.000000e+00> : vector<8x128xf32>
    %4 = tpu.matmul %1, %2, %cst {dimension_numbers = #tpu.dot_dimension_numbers<[1], [0], [0], [1], [0, 0, 1, 1], [], []>} : vector<8x1024xbf16>, vector<1024x128xbf16>, vector<8x128xf32> -> vector<8x128xf32>
    %5 = vector.broadcast %3 : vector<1x128xf32> to vector<8x128xf32>
    %6 = arith.addf %4, %5 : vector<8x128xf32>
    %cst_5 = arith.constant 0.000000e+00 : f32
    %7 = vector.broadcast %cst_5 : f32 to vector<8x128xf32>
    %8 = arith.maximumf %6, %7 : vector<8x128xf32>
    %9 = arith.truncf %8 : vector<8x128xf32> to vector<8x128xbf16>
    %c0_6 = arith.constant 0 : index
    %c0_7 = arith.constant 0 : index
    %10 = vector.load %arg4[%c0_6, %c0_7] : memref<128x128xbf16, #tpu.memory_space<vmem>>, vector<128x128xbf16>
    %c0_8 = arith.constant 0 : index
    %c0_9 = arith.constant 0 : index
    %11 = vector.load %arg5[%c0_8, %c0_9] : memref<1x128xf32, #tpu.memory_space<vmem>>, vector<1x128xf32>
    %cst_10 = arith.constant dense<0.000000e+00> : vector<8x128xf32>
    %12 = tpu.matmul %9, %10, %cst_10 {dimension_numbers = #tpu.dot_dimension_numbers<[1], [0], [0], [1], [0, 0, 1, 1], [], []>} : vector<8x128xbf16>, vector<128x128xbf16>, vector<8x128xf32> -> vector<8x128xf32>
    %13 = vector.broadcast %11 : vector<1x128xf32> to vector<8x128xf32>
    %14 = arith.addf %12, %13 : vector<8x128xf32>
    %cst_11 = arith.constant 0.000000e+00 : f32
    %15 = vector.broadcast %cst_11 : f32 to vector<8x128xf32>
    %16 = arith.maximumf %14, %15 : vector<8x128xf32>
    %17 = arith.truncf %16 : vector<8x128xf32> to vector<8x128xbf16>
    %c0_12 = arith.constant 0 : index
    %c0_13 = arith.constant 0 : index
    %18 = vector.load %arg6[%c0_12, %c0_13] : memref<128x128xbf16, #tpu.memory_space<vmem>>, vector<128x128xbf16>
    %cst_14 = arith.constant dense<0.000000e+00> : vector<8x128xf32>
    %19 = tpu.matmul %17, %18, %cst_14 {dimension_numbers = #tpu.dot_dimension_numbers<[1], [0], [0], [1], [0, 0, 1, 1], [], []>} : vector<8x128xbf16>, vector<128x128xbf16>, vector<8x128xf32> -> vector<8x128xf32>
    %c0_15 = arith.constant 0 : index
    %c0_16 = arith.constant 0 : index
    %20 = vector.load %arg7[%c0_15, %c0_16] : memref<1x128xf32, #tpu.memory_space<vmem>>, vector<1x128xf32>
    %21 = vector.broadcast %20 : vector<1x128xf32> to vector<8x128xf32>
    %22 = arith.addf %19, %21 : vector<8x128xf32>
    %cst_17 = arith.constant 0.000000e+00 : f32
    %23 = vector.broadcast %cst_17 : f32 to vector<8x128xf32>
    %24 = arith.maximumf %22, %23 : vector<8x128xf32>
    %25 = math.absf %22 : vector<8x128xf32>
    %cst_18 = arith.constant 0.000000e+00 : f32
    %26 = vector.broadcast %cst_18 : f32 to vector<8x128xf32>
    %27 = arith.subf %26, %25 : vector<8x128xf32>
    %28 = math.exp %27 : vector<8x128xf32>
    %29 = math.log1p %28 : vector<8x128xf32>
    %30 = arith.addf %24, %29 : vector<8x128xf32>
    %cst_19 = arith.constant 9.99999974E-6 : f32
    %31 = vector.broadcast %cst_19 : f32 to vector<8x128xf32>
    %32 = arith.addf %30, %31 : vector<8x128xf32>
    %33 = tpu.iota {dimensions = array<i32: 1>} : vector<1x128xi32>
    %c0_i32 = arith.constant 0 : i32
    %34 = vector.broadcast %c0_i32 : i32 to vector<1x128xi32>
    %35 = arith.addi %33, %34 : vector<1x128xi32>
    %c8_i32 = arith.constant 8 : i32
    %36 = vector.broadcast %c8_i32 : i32 to vector<1x128xi32>
    %37 = arith.cmpi sge, %35, %36 : vector<1x128xi32>
    %c16_i32 = arith.constant 16 : i32
    %38 = vector.broadcast %c16_i32 : i32 to vector<1x128xi32>
    %39 = arith.cmpi slt, %35, %38 : vector<1x128xi32>
    %40 = arith.andi %37, %39 : vector<1x128xi1>
    %41 = vector.shape_cast %40 : vector<1x128xi1> to vector<1x128xi1>
    %42 = vector.broadcast %41 : vector<1x128xi1> to vector<8x128xi1>
    %43 = arith.select %42, %32, %22 : vector<8x128xi1>, vector<8x128xf32>
    %c0_20 = arith.constant 0 : index
    %c0_21 = arith.constant 0 : index
    %44 = vector.load %arg8[%c0_20, %c0_21] : memref<8x128xf32, #tpu.memory_space<vmem>>, vector<8x128xf32>
    tpu.vector_store %arg8[%c0_20, %c0_21], %43 {strides = array<i32>} : memref<8x128xf32, #tpu.memory_space<vmem>>, vector<8x128xf32>,
    return
  }
  func.func @transform_0(%arg0: i32) -> (i32, i32) {
    %c0_i32 = arith.constant 0 : i32
    %c0_i32_0 = arith.constant 0 : i32
    return %arg0, %c0_i32 : i32, i32
  }
  func.func @transform_1(%arg0: i32) -> (i32, i32) {
    %c0_i32 = arith.constant 0 : i32
    %c0_i32_0 = arith.constant 0 : i32
    %c0_i32_1 = arith.constant 0 : i32
    return %c0_i32, %c0_i32_0 : i32, i32
  }
  func.func @transform_2(%arg0: i32) -> (i32, i32) {
    %c0_i32 = arith.constant 0 : i32
    %c0_i32_0 = arith.constant 0 : i32
    %c0_i32_1 = arith.constant 0 : i32
    return %c0_i32, %c0_i32_0 : i32, i32
  }
  func.func @transform_3(%arg0: i32) -> (i32, i32) {
    %c0_i32 = arith.constant 0 : i32
    %c0_i32_0 = arith.constant 0 : i32
    %c0_i32_1 = arith.constant 0 : i32
    return %c0_i32, %c0_i32_0 : i32, i32
  }
  func.func @transform_4(%arg0: i32) -> (i32, i32) {
    %c0_i32 = arith.constant 0 : i32
    %c0_i32_0 = arith.constant 0 : i32
    %c0_i32_1 = arith.constant 0 : i32
    return %c0_i32, %c0_i32_0 : i32, i32
  }
  func.func @transform_5(%arg0: i32) -> (i32, i32) {
    %c0_i32 = arith.constant 0 : i32
    %c0_i32_0 = arith.constant 0 : i32
    %c0_i32_1 = arith.constant 0 : i32
    return %c0_i32, %c0_i32_0 : i32, i32
  }
  func.func @transform_6(%arg0: i32) -> (i32, i32) {
    %c0_i32 = arith.constant 0 : i32
    %c0_i32_0 = arith.constant 0 : i32
    %c0_i32_1 = arith.constant 0 : i32
    return %c0_i32, %c0_i32_0 : i32, i32
  }
  func.func @transform_7(%arg0: i32) -> (i32, i32) {
    %c0_i32 = arith.constant 0 : i32
    %c0_i32_0 = arith.constant 0 : i32
    return %arg0, %c0_i32 : i32, i32
  }
}

module attributes {stable_mosaic.version = 11 : i64} {
  func.func @_enc_linear_kernel(%arg0: i32, %arg1: memref<8x1024xf32, #tpu.memory_space<vmem>>, %arg2: memref<1024x128xbf16, #tpu.memory_space<vmem>>, %arg3: memref<1x128xf32, #tpu.memory_space<vmem>>, %arg4: memref<128x128xbf16, #tpu.memory_space<vmem>>, %arg5: memref<1x128xf32, #tpu.memory_space<vmem>>, %arg6: memref<128x128xbf16, #tpu.memory_space<vmem>>, %arg7: memref<1x128xf32, #tpu.memory_space<vmem>>, %arg8: memref<8x128xf32, #tpu.memory_space<vmem>>) attributes {dimension_semantics = [#tpu.dimension_semantics<parallel>], iteration_bounds = array<i64: 1>, scalar_prefetch = 0 : i64, scratch_operands = 0 : i64, tpu.core_type = #tpu.core_type<tc>, window_params = [{transform_indices = @transform_0, window_bounds = array<i64: 8, 1024>}, {pipeline_mode = #tpu.pipeline_mode<synchronous>, transform_indices = @transform_1, window_bounds = array<i64: 1024, 128>}, {pipeline_mode = #tpu.pipeline_mode<synchronous>, transform_indices = @transform_2, window_bounds = array<i64: 1, 128>}, {pipeline_mode = #tpu.pipeline_mode<synchronous>, transform_indices = @transform_3, window_bounds = array<i64: 128, 128>}, {pipeline_mode = #tpu.pipeline_mode<synchronous>, transform_indices = @transform_4, window_bounds = array<i64: 1, 128>}, {pipeline_mode = #tpu.pipeline_mode<synchronous>, transform_indices = @transform_5, window_bounds = array<i64: 128, 128>}, {pipeline_mode = #tpu.pipeline_mode<synchronous>, transform_indices = @transform_6, window_bounds = array<i64: 1, 128>}, {transform_indices = @transform_7, window_bounds = array<i64: 8, 128>}]} {
    %c0 = arith.constant 0 : index
    %c0_0 = arith.constant 0 : index
    %0 = vector.load %arg1[%c0, %c0_0] : memref<8x1024xf32, #tpu.memory_space<vmem>>, vector<8x1024xf32>
    %1 = arith.truncf %0 : vector<8x1024xf32> to vector<8x1024xbf16>
    %c0_1 = arith.constant 0 : index
    %c0_2 = arith.constant 0 : index
    %2 = vector.load %arg2[%c0_1, %c0_2] : memref<1024x128xbf16, #tpu.memory_space<vmem>>, vector<1024x128xbf16>
    %c0_3 = arith.constant 0 : index
    %c0_4 = arith.constant 0 : index
    %3 = vector.load %arg3[%c0_3, %c0_4] : memref<1x128xf32, #tpu.memory_space<vmem>>, vector<1x128xf32>
    %cst = arith.constant dense<0.000000e+00> : vector<8x128xf32>
    %4 = tpu.matmul %1, %2, %cst {dimension_numbers = #tpu.dot_dimension_numbers<[1], [0], [0], [1], [0, 0, 1, 1], [], []>} : vector<8x1024xbf16>, vector<1024x128xbf16>, vector<8x128xf32> -> vector<8x128xf32>
    %5 = vector.broadcast %3 : vector<1x128xf32> to vector<8x128xf32>
    %6 = arith.addf %4, %5 : vector<8x128xf32>
    %cst_5 = arith.constant 0.000000e+00 : f32
    %7 = vector.broadcast %cst_5 : f32 to vector<8x128xf32>
    %8 = arith.maximumf %6, %7 : vector<8x128xf32>
    %9 = arith.truncf %8 : vector<8x128xf32> to vector<8x128xbf16>
    %c0_6 = arith.constant 0 : index
    %c0_7 = arith.constant 0 : index
    %10 = vector.load %arg4[%c0_6, %c0_7] : memref<128x128xbf16, #tpu.memory_space<vmem>>, vector<128x128xbf16>
    %c0_8 = arith.constant 0 : index
    %c0_9 = arith.constant 0 : index
    %11 = vector.load %arg5[%c0_8, %c0_9] : memref<1x128xf32, #tpu.memory_space<vmem>>, vector<1x128xf32>
    %cst_10 = arith.constant dense<0.000000e+00> : vector<8x128xf32>
    %12 = tpu.matmul %9, %10, %cst_10 {dimension_numbers = #tpu.dot_dimension_numbers<[1], [0], [0], [1], [0, 0, 1, 1], [], []>} : vector<8x128xbf16>, vector<128x128xbf16>, vector<8x128xf32> -> vector<8x128xf32>
    %13 = vector.broadcast %11 : vector<1x128xf32> to vector<8x128xf32>
    %14 = arith.addf %12, %13 : vector<8x128xf32>
    %cst_11 = arith.constant 0.000000e+00 : f32
    %15 = vector.broadcast %cst_11 : f32 to vector<8x128xf32>
    %16 = arith.maximumf %14, %15 : vector<8x128xf32>
    %17 = arith.truncf %16 : vector<8x128xf32> to vector<8x128xbf16>
    %c0_12 = arith.constant 0 : index
    %c0_13 = arith.constant 0 : index
    %18 = vector.load %arg6[%c0_12, %c0_13] : memref<128x128xbf16, #tpu.memory_space<vmem>>, vector<128x128xbf16>
    %cst_14 = arith.constant dense<0.000000e+00> : vector<8x128xf32>
    %19 = tpu.matmul %17, %18, %cst_14 {dimension_numbers = #tpu.dot_dimension_numbers<[1], [0], [0], [1], [0, 0, 1, 1], [], []>} : vector<8x128xbf16>, vector<128x128xbf16>, vector<8x128xf32> -> vector<8x128xf32>
    %c0_15 = arith.constant 0 : index
    %c0_16 = arith.constant 0 : index
    %20 = vector.load %arg7[%c0_15, %c0_16] : memref<1x128xf32, #tpu.memory_space<vmem>>, vector<1x128xf32>
    %21 = vector.broadcast %20 : vector<1x128xf32> to vector<8x128xf32>
    %22 = arith.addf %19, %21 : vector<8x128xf32>
    %cst_17 = arith.constant 0.000000e+00 : f32
    %23 = vector.broadcast %cst_17 : f32 to vector<8x128xf32>
    %24 = arith.maximumf %22, %23 : vector<8x128xf32>
    %25 = math.absf %22 : vector<8x128xf32>
    %cst_18 = arith.constant 0.000000e+00 : f32
    %26 = vector.broadcast %cst_18 : f32 to vector<8x128xf32>
    %27 = arith.subf %26, %25 : vector<8x128xf32>
    %28 = math.exp %27 : vector<8x128xf32>
    %29 = math.log1p %28 : vector<8x128xf32>
    %30 = arith.addf %24, %29 : vector<8x128xf32>
    %cst_19 = arith.constant 9.99999974E-6 : f32
    %31 = vector.broadcast %cst_19 : f32 to vector<8x128xf32>
    %32 = arith.addf %30, %31 : vector<8x128xf32>
    %33 = tpu.iota {dimensions = array<i32: 1>} : vector<1x128xi32>
    %c0_i32 = arith.constant 0 : i32
    %34 = vector.broadcast %c0_i32 : i32 to vector<1x128xi32>
    %35 = arith.addi %33, %34 : vector<1x128xi32>
    %c8_i32 = arith.constant 8 : i32
    %36 = vector.broadcast %c8_i32 : i32 to vector<1x128xi32>
    %37 = arith.cmpi sge, %35, %36 : vector<1x128xi32>
    %c16_i32 = arith.constant 16 : i32
    %38 = vector.broadcast %c16_i32 : i32 to vector<1x128xi32>
    %39 = arith.cmpi slt, %35, %38 : vector<1x128xi32>
    %40 = arith.andi %37, %39 : vector<1x128xi1>
    %41 = vector.shape_cast %40 : vector<1x128xi1> to vector<1x128xi1>
    %42 = vector.broadcast %41 : vector<1x128xi1> to vector<8x128xi1>
    %43 = arith.select %42, %32, %22 : vector<8x128xi1>, vector<8x128xf32>
    %c0_20 = arith.constant 0 : index
    %c0_21 = arith.constant 0 : index
    %44 = vector.load %arg8[%c0_20, %c0_21] : memref<8x128xf32, #tpu.memory_space<vmem>>, vector<8x128xf32>
    tpu.vector_store %arg8[%c0_20, %c0_21], %43 {strides = array<i32>} : memref<8x128xf32, #tpu.memory_space<vmem>>, vector<8x128xf32>,
    return
  }
  func.func @transform_0(%arg0: i32) -> (i32, i32) {
    %c0_i32 = arith.constant 0 : i32
    %c0_i32_0 = arith.constant 0 : i32
    return %arg0, %c0_i32 : i32, i32
  }
  func.func @transform_1(%arg0: i32) -> (i32, i32) {
    %c0_i32 = arith.constant 0 : i32
    %c0_i32_0 = arith.constant 0 : i32
    %c0_i32_1 = arith.constant 0 : i32
    return %c0_i32, %c0_i32_0 : i32, i32
  }
  func.func @transform_2(%arg0: i32) -> (i32, i32) {
    %c0_i32 = arith.constant 0 : i32
    %c0_i32_0 = arith.constant 0 : i32
    %c0_i32_1 = arith.constant 0 : i32
    return %c0_i32, %c0_i32_0 : i32, i32
  }
  func.func @transform_3(%arg0: i32) -> (i32, i32) {
    %c0_i32 = arith.constant 0 : i32
    %c0_i32_0 = arith.constant 0 : i32
    %c0_i32_1 = arith.constant 0 : i32
    return %c0_i32, %c0_i32_0 : i32, i32
  }
  func.func @transform_4(%arg0: i32) -> (i32, i32) {
    %c0_i32 = arith.constant 0 : i32
    %c0_i32_0 = arith.constant 0 : i32
    %c0_i32_1 = arith.constant 0 : i32
    return %c0_i32, %c0_i32_0 : i32, i32
  }
  func.func @transform_5(%arg0: i32) -> (i32, i32) {
    %c0_i32 = arith.constant 0 : i32
    %c0_i32_0 = arith.constant 0 : i32
    %c0_i32_1 = arith.constant 0 : i32
    return %c0_i32, %c0_i32_0 : i32, i32
  }
  func.func @transform_6(%arg0: i32) -> (i32, i32) {
    %c0_i32 = arith.constant 0 : i32
    %c0_i32_0 = arith.constant 0 : i32
    %c0_i32_1 = arith.constant 0 : i32
    return %c0_i32, %c0_i32_0 : i32, i32
  }
  func.func @transform_7(%arg0: i32) -> (i32, i32) {
    %c0_i32 = arith.constant 0 : i32
    %c0_i32_0 = arith.constant 0 : i32
    return %arg0, %c0_i32 : i32, i32
  }
}

</mosaic_0001>

<llo_original>
// kernel: tpu_custom_call.1
$region0: #{tpu_custom_call.1}
  #allocation0 [shape = 'u32[]', space=smem, size = 0x4, offset = 0x4, fixed_abs, tag = 'smem constant byte address 0x4 - core index']
  #allocation1 [shape = 'u32[144,128]{1,0:T(1,128)}', space=vmem, size = 0x12000, scoped, tag = 'internal scratch']
  %s0 = inlined_call_operand.hbm [shape: f32[8,1024], index: 0, kind: input, shape index: {}]
  %s1 = inlined_call_operand.hbm [shape: bf16[1024,128], index: 1, kind: input, shape index: {}]
  %s2 = inlined_call_operand.vmem [shape: f32[1,128], index: 2, kind: input, shape index: {}]
  %s3 = inlined_call_operand.hbm [shape: bf16[128,128], index: 3, kind: input, shape index: {}]
  %s4 = inlined_call_operand.vmem [shape: f32[1,128], index: 4, kind: input, shape index: {}]
  %s5 = inlined_call_operand.hbm [shape: bf16[128,128], index: 5, kind: input, shape index: {}]
  %s6 = inlined_call_operand.vmem [shape: f32[1,128], index: 6, kind: input, shape index: {}]
  %s7 = inlined_call_operand.hbm [shape: f32[8,128], index: 7, kind: output, shape index: {}]
  %s8 = sld [smem:[#allocation0]]
  $region54: #{tpu_custom_call.1} parent=0
    _
  %s10 = ssub.s32 1, %s8
  %s11 = scalar_select 0, %s10, %s8
  $region1: #{tpu_custom_call.1} parent=0
    #allocation2 [shape = 'u8[32768]{0}', space=vmem, size = 0x8000, scoped, tag = 'input window, operand 0, single buffered']
    #allocation3 [shape = 's32[1]{0}', space=sflag, size = 0x4, scoped, tag = 'scoped memory for tpu_custom_call.1']
    #allocation4 [shape = 's32[1]{0}', space=sflag, size = 0x4, scoped, tag = 'scoped memory for tpu_custom_call.1']
    #allocation5 [shape = 'u8[262144]{0}', space=vmem, size = 0x40000, scoped, tag = 'input window, operand 1, single buffered']
    #allocation6 [shape = 's32[1]{0}', space=sflag, size = 0x4, scoped, tag = 'scoped memory for tpu_custom_call.1']
    #allocation7 [shape = 'u8[32768]{0}', space=vmem, size = 0x8000, scoped, tag = 'input window, operand 3, single buffered']
    #allocation8 [shape = 'u8[32768]{0}', space=vmem, size = 0x8000, scoped, tag = 'input window, operand 5, single buffered']
    #allocation9 [shape = 's32[1]{0}', space=sflag, size = 0x4, scoped, tag = 'scoped memory for tpu_custom_call.1']
    #allocation10 [shape = 'u8[4096]{0}', space=vmem, size = 0x1000, scoped, tag = 'output window, operand 0, single buffered']
    %12 = vsyncpa [#allocation3], 0
    %13 = vsyncpa [#allocation6], 0
    %14 = vsyncpa [#allocation9], 0
    %15 = vsyncpa [#allocation4], 0
    // Predicated region
    $region2: #{tpu_custom_call.1} parent=1 // pred_check
      _
    $region3: #{tpu_custom_call.1} parent=1 // pred_check_branch
      %17 = sbr.rel (0) target = $region5
    $region4: #{tpu_custom_call.1} parent=1 // pred_region
      %s19 = ssub.s32 1024, 1024
      %20 = vsyncadd [#allocation3], %s19
      %s22 = sshll.u32 [#allocation2], 4
      %s23 = int_to_ptr.vmem [resolvable:$true] %s22
      %25 = dma.hbm_to_vmem [thread:$0]  %s0, 1024, %s23, [#allocation3]
    $region5: #{tpu_custom_call.1} parent=1 // pred_fallthru
      _
    // Predicated region
    $region6: #{tpu_custom_call.1} parent=1 // pred_check
      _
    $region7: #{tpu_custom_call.1} parent=1 // pred_check_branch
      %27 = sbr.rel (0) target = $region9
    $region8: #{tpu_custom_call.1} parent=1 // pred_region
      %s29 = ssub.s32 8192, 8192
      %30 = vsyncadd [#allocation6], %s29
      %s31 = sshll.u32 [#allocation5], 4
      %s32 = int_to_ptr.vmem [resolvable:$true] %s31
      %37 = dma.hbm_to_vmem [thread:$0]  %s1, 8192, %s32, [#allocation6], 64, 64, 4
    $region9: #{tpu_custom_call.1} parent=1 // pred_fallthru
      _
    // Predicated region
    $region10: #{tpu_custom_call.1} parent=1 // pred_check
      _
    $region11: #{tpu_custom_call.1} parent=1 // pred_check_branch
      %39 = sbr.rel (0) target = $region13
    $region12: #{tpu_custom_call.1} parent=1 // pred_region
      _
    $region13: #{tpu_custom_call.1} parent=1 // pred_fallthru
      _
    // Predicated region
    $region14: #{tpu_custom_call.1} parent=1 // pred_check
      _
    $region15: #{tpu_custom_call.1} parent=1 // pred_check_branch
      %41 = sbr.rel (0) target = $region17
    $region16: #{tpu_custom_call.1} parent=1 // pred_region
      %s43 = ssub.s32 1024, 1024
      %44 = vsyncadd [#allocation6], %s43
      %s45 = sshll.u32 [#allocation7], 4
      %s46 = int_to_ptr.vmem [resolvable:$true] %s45
      %51 = dma.hbm_to_vmem [thread:$0]  %s3, 1024, %s46, [#allocation6], 64, 64, 4
    $region17: #{tpu_custom_call.1} parent=1 // pred_fallthru
      _
    // Predicated region
    $region18: #{tpu_custom_call.1} parent=1 // pred_check
      _
    $region19: #{tpu_custom_call.1} parent=1 // pred_check_branch
      %53 = sbr.rel (0) target = $region21
    $region20: #{tpu_custom_call.1} parent=1 // pred_region
      _
    $region21: #{tpu_custom_call.1} parent=1 // pred_fallthru
      _
    // Predicated region
    $region22: #{tpu_custom_call.1} parent=1 // pred_check
      _
    $region23: #{tpu_custom_call.1} parent=1 // pred_check_branch
      %55 = sbr.rel (0) target = $region25
    $region24: #{tpu_custom_call.1} parent=1 // pred_region
      %s57 = ssub.s32 1024, 1024
      %58 = vsyncadd [#allocation9], %s57
      %s59 = sshll.u32 [#allocation8], 4
      %s60 = int_to_ptr.vmem [resolvable:$true] %s59
      %65 = dma.hbm_to_vmem [thread:$0]  %s5, 1024, %s60, [#allocation9], 64, 64, 4
    $region25: #{tpu_custom_call.1} parent=1 // pred_fallthru
      _
    // Predicated region
    $region26: #{tpu_custom_call.1} parent=1 // pred_check
      _
    $region27: #{tpu_custom_call.1} parent=1 // pred_check_branch
      %67 = sbr.rel (0) target = $region29
    $region28: #{tpu_custom_call.1} parent=1 // pred_region
      _
    $region29: #{tpu_custom_call.1} parent=1 // pred_fallthru
      _
    // Predicated region
    $region30: #{tpu_custom_call.1} parent=1 // pred_check
      _
    $region31: #{tpu_custom_call.1} parent=1 // pred_check_branch
      %69 = sbr.rel (0) target = $region33
    $region32: #{tpu_custom_call.1} parent=1 // pred_region
      %70 = dma.done [#allocation3], 1024
    $region33: #{tpu_custom_call.1} parent=1 // pred_fallthru
      _
    // Predicated region
    $region34: #{tpu_custom_call.1} parent=1 // pred_check
      _
    $region35: #{tpu_custom_call.1} parent=1 // pred_check_branch
      %72 = sbr.rel (0) target = $region37
    $region36: #{tpu_custom_call.1} parent=1 // pred_region
      %73 = dma.done [#allocation6], 8192
    $region37: #{tpu_custom_call.1} parent=1 // pred_fallthru
      _
    // Predicated region
    $region38: #{tpu_custom_call.1} parent=1 // pred_check
      _
    $region39: #{tpu_custom_call.1} parent=1 // pred_check_branch
      %75 = sbr.rel (0) target = $region41
    $region40: #{tpu_custom_call.1} parent=1 // pred_region
      %76 = dma.done [#allocation6], 1024
    $region41: #{tpu_custom_call.1} parent=1 // pred_fallthru
      _
    // Predicated region
    $region42: #{tpu_custom_call.1} parent=1 // pred_check
      _
    $region43: #{tpu_custom_call.1} parent=1 // pred_check_branch
      %78 = sbr.rel (0) target = $region45
    $region44: #{tpu_custom_call.1} parent=1 // pred_region
      %79 = dma.done [#allocation9], 1024
    $region45: #{tpu_custom_call.1} parent=1 // pred_fallthru
      _
    %v81 = vld [vmem:[#allocation2] sm:$0xff]
    %v82 = vld [vmem:[#allocation2 + $0x8] sm:$0xff]
    %v83 = vld [vmem:[#allocation2 + $0x10] sm:$0xff]
    %v84 = vld [vmem:[#allocation2 + $0x18] sm:$0xff]
    %v85 = vld [vmem:[#allocation2 + $0x20] sm:$0xff]
    %v86 = vld [vmem:[#allocation2 + $0x28] sm:$0xff]
    %v87 = vld [vmem:[#allocation2 + $0x30] sm:$0xff]
    %v88 = vld [vmem:[#allocation2 + $0x38] sm:$0xff]
    %v89 = vpack.c.bf16 %v81, %v81
    %v90 = vpack.c.bf16 %v82, %v82
    %v91 = vpack.c.bf16 %v83, %v83
    %v92 = vpack.c.bf16 %v84, %v84
    %v93 = vpack.c.bf16 %v85, %v85
    %v94 = vpack.c.bf16 %v86, %v86
    %v95 = vpack.c.bf16 %v87, %v87
    %v96 = vpack.c.bf16 %v88, %v88
    %v97 = vld [vmem:[#allocation5] sm:$0xf]
    %v98 = vld [vmem:[#allocation5 + $0x4] sm:$0xf]
    %v99 = vld [vmem:[#allocation5 + $0x8] sm:$0xf]
    %v100 = vld [vmem:[#allocation5 + $0xc] sm:$0xf]
    %v101 = vld [vmem:[#allocation5 + $0x10] sm:$0xf]
    %v102 = vld [vmem:[#allocation5 + $0x14] sm:$0xf]
    %v103 = vld [vmem:[#allocation5 + $0x18] sm:$0xf]
    %v104 = vld [vmem:[#allocation5 + $0x1c] sm:$0xf]
    %v105 = vld [vmem:[#allocation5 + $0x20] sm:$0xf]
    %v106 = vld [vmem:[#allocation5 + $0x24] sm:$0xf]
    %v107 = vld [vmem:[#allocation5 + $0x28] sm:$0xf]
    %v108 = vld [vmem:[#allocation5 + $0x2c] sm:$0xf]
    %v109 = vld [vmem:[#allocation5 + $0x30] sm:$0xf]
    %v110 = vld [vmem:[#allocation5 + $0x34] sm:$0xf]
    %v111 = vld [vmem:[#allocation5 + $0x38] sm:$0xf]
    %v112 = vld [vmem:[#allocation5 + $0x3c] sm:$0xf]
    %v113 = vld [vmem:[#allocation5 + $0x40] sm:$0xf]
    %v114 = vld [vmem:[#allocation5 + $0x44] sm:$0xf]
    %v115 = vld [vmem:[#allocation5 + $0x48] sm:$0xf]
    %v116 = vld [vmem:[#allocation5 + $0x4c] sm:$0xf]
    %v117 = vld [vmem:[#allocation5 + $0x50] sm:$0xf]
    %v118 = vld [vmem:[#allocation5 + $0x54] sm:$0xf]
    %v119 = vld [vmem:[#allocation5 + $0x58] sm:$0xf]
    %v120 = vld [vmem:[#allocation5 + $0x5c] sm:$0xf]
    %v121 = vld [vmem:[#allocation5 + $0x60] sm:$0xf]
    %v122 = vld [vmem:[#allocation5 + $0x64] sm:$0xf]
    %v123 = vld [vmem:[#allocation5 + $0x68] sm:$0xf]
    %v124 = vld [vmem:[#allocation5 + $0x6c] sm:$0xf]
    %v125 = vld [vmem:[#allocation5 + $0x70] sm:$0xf]
    %v126 = vld [vmem:[#allocation5 + $0x74] sm:$0xf]
    %v127 = vld [vmem:[#allocation5 + $0x78] sm:$0xf]
    %v128 = vld [vmem:[#allocation5 + $0x7c] sm:$0xf]
    %v129 = vld [vmem:[#allocation5 + $0x80] sm:$0xf]
    %v130 = vld [vmem:[#allocation5 + $0x84] sm:$0xf]
    %v131 = vld [vmem:[#allocation5 + $0x88] sm:$0xf]
    %v132 = vld [vmem:[#allocation5 + $0x8c] sm:$0xf]
    %v133 = vld [vmem:[#allocation5 + $0x90] sm:$0xf]
    %v134 = vld [vmem:[#allocation5 + $0x94] sm:$0xf]
    %v135 = vld [vmem:[#allocation5 + $0x98] sm:$0xf]
    %v136 = vld [vmem:[#allocation5 + $0x9c] sm:$0xf]
    %v137 = vld [vmem:[#allocation5 + $0xa0] sm:$0xf]
    %v138 = vld [vmem:[#allocation5 + $0xa4] sm:$0xf]
    %v139 = vld [vmem:[#allocation5 + $0xa8] sm:$0xf]
    %v140 = vld [vmem:[#allocation5 + $0xac] sm:$0xf]
    %v141 = vld [vmem:[#allocation5 + $0xb0] sm:$0xf]
    %v142 = vld [vmem:[#allocation5 + $0xb4] sm:$0xf]
    %v143 = vld [vmem:[#allocation5 + $0xb8] sm:$0xf]
    %v144 = vld [vmem:[#allocation5 + $0xbc] sm:$0xf]
    %v145 = vld [vmem:[#allocation5 + $0xc0] sm:$0xf]
    %v146 = vld [vmem:[#allocation5 + $0xc4] sm:$0xf]
    %v147 = vld [vmem:[#allocation5 + $0xc8] sm:$0xf]
    %v148 = vld [vmem:[#allocation5 + $0xcc] sm:$0xf]
    %v149 = vld [vmem:[#allocation5 + $0xd0] sm:$0xf]
    %v150 = vld [vmem:[#allocation5 + $0xd4] sm:$0xf]
    %v151 = vld [vmem:[#allocation5 + $0xd8] sm:$0xf]
    %v152 = vld [vmem:[#allocation5 + $0xdc] sm:$0xf]
    %v153 = vld [vmem:[#allocation5 + $0xe0] sm:$0xf]
    %v154 = vld [vmem:[#allocation5 + $0xe4] sm:$0xf]
    %v155 = vld [vmem:[#allocation5 + $0xe8] sm:$0xf]
    %v156 = vld [vmem:[#allocation5 + $0xec] sm:$0xf]
    %v157 = vld [vmem:[#allocation5 + $0xf0] sm:$0xf]
    %v158 = vld [vmem:[#allocation5 + $0xf4] sm:$0xf]
    %v159 = vld [vmem:[#allocation5 + $0xf8] sm:$0xf]
    %v160 = vld [vmem:[#allocation5 + $0xfc] sm:$0xf]
    %v161 = vld [vmem:[#allocation5 + $0x100] sm:$0xf]
    %v162 = vld [vmem:[#allocation5 + $0x104] sm:$0xf]
    %v163 = vld [vmem:[#allocation5 + $0x108] sm:$0xf]
    %v164 = vld [vmem:[#allocation5 + $0x10c] sm:$0xf]
    %v165 = vld [vmem:[#allocation5 + $0x110] sm:$0xf]
    %v166 = vld [vmem:[#allocation5 + $0x114] sm:$0xf]
    %v167 = vld [vmem:[#allocation5 + $0x118] sm:$0xf]
    %v168 = vld [vmem:[#allocation5 + $0x11c] sm:$0xf]
    %v169 = vld [vmem:[#allocation5 + $0x120] sm:$0xf]
    %v170 = vld [vmem:[#allocation5 + $0x124] sm:$0xf]
    %v171 = vld [vmem:[#allocation5 + $0x128] sm:$0xf]
    %v172 = vld [vmem:[#allocation5 + $0x12c] sm:$0xf]
    %v173 = vld [vmem:[#allocation5 + $0x130] sm:$0xf]
    %v174 = vld [vmem:[#allocation5 + $0x134] sm:$0xf]
    %v175 = vld [vmem:[#allocation5 + $0x138] sm:$0xf]
    %v176 = vld [vmem:[#allocation5 + $0x13c] sm:$0xf]
    %v177 = vld [vmem:[#allocation5 + $0x140] sm:$0xf]
    %v178 = vld [vmem:[#allocation5 + $0x144] sm:$0xf]
    %v179 = vld [vmem:[#allocation5 + $0x148] sm:$0xf]
    %v180 = vld [vmem:[#allocation5 + $0x14c] sm:$0xf]
    %v181 = vld [vmem:[#allocation5 + $0x150] sm:$0xf]
    %v182 = vld [vmem:[#allocation5 + $0x154] sm:$0xf]
    %v183 = vld [vmem:[#allocation5 + $0x158] sm:$0xf]
    %v184 = vld [vmem:[#allocation5 + $0x15c] sm:$0xf]
    %v185 = vld [vmem:[#allocation5 + $0x160] sm:$0xf]
    %v186 = vld [vmem:[#allocation5 + $0x164] sm:$0xf]
    %v187 = vld [vmem:[#allocation5 + $0x168] sm:$0xf]
    %v188 = vld [vmem:[#allocation5 + $0x16c] sm:$0xf]
    %v189 = vld [vmem:[#allocation5 + $0x170] sm:$0xf]
    %v190 = vld [vmem:[#allocation5 + $0x174] sm:$0xf]
    %v191 = vld [vmem:[#allocation5 + $0x178] sm:$0xf]
    %v192 = vld [vmem:[#allocation5 + $0x17c] sm:$0xf]
    %v193 = vld [vmem:[#allocation5 + $0x180] sm:$0xf]
    %v194 = vld [vmem:[#allocation5 + $0x184] sm:$0xf]
    %v195 = vld [vmem:[#allocation5 + $0x188] sm:$0xf]
    %v196 = vld [vmem:[#allocation5 + $0x18c] sm:$0xf]
    %v197 = vld [vmem:[#allocation5 + $0x190] sm:$0xf]
    %v198 = vld [vmem:[#allocation5 + $0x194] sm:$0xf]
    %v199 = vld [vmem:[#allocation5 + $0x198] sm:$0xf]
    %v200 = vld [vmem:[#allocation5 + $0x19c] sm:$0xf]
    %v201 = vld [vmem:[#allocation5 + $0x1a0] sm:$0xf]
    %v202 = vld [vmem:[#allocation5 + $0x1a4] sm:$0xf]
    %v203 = vld [vmem:[#allocation5 + $0x1a8] sm:$0xf]
    %v204 = vld [vmem:[#allocation5 + $0x1ac] sm:$0xf]
    %v205 = vld [vmem:[#allocation5 + $0x1b0] sm:$0xf]
    %v206 = vld [vmem:[#allocation5 + $0x1b4] sm:$0xf]
    %v207 = vld [vmem:[#allocation5 + $0x1b8] sm:$0xf]
    %v208 = vld [vmem:[#allocation5 + $0x1bc] sm:$0xf]
    %v209 = vld [vmem:[#allocation5 + $0x1c0] sm:$0xf]
    %v210 = vld [vmem:[#allocation5 + $0x1c4] sm:$0xf]
    %v211 = vld [vmem:[#allocation5 + $0x1c8] sm:$0xf]
    %v212 = vld [vmem:[#allocation5 + $0x1cc] sm:$0xf]
    %v213 = vld [vmem:[#allocation5 + $0x1d0] sm:$0xf]
    %v214 = vld [vmem:[#allocation5 + $0x1d4] sm:$0xf]
    %v215 = vld [vmem:[#allocation5 + $0x1d8] sm:$0xf]
    %v216 = vld [vmem:[#allocation5 + $0x1dc] sm:$0xf]
    %v217 = vld [vmem:[#allocation5 + $0x1e0] sm:$0xf]
    %v218 = vld [vmem:[#allocation5 + $0x1e4] sm:$0xf]
    %v219 = vld [vmem:[#allocation5 + $0x1e8] sm:$0xf]
    %v220 = vld [vmem:[#allocation5 + $0x1ec] sm:$0xf]
    %v221 = vld [vmem:[#allocation5 + $0x1f0] sm:$0xf]
    %v222 = vld [vmem:[#allocation5 + $0x1f4] sm:$0xf]
    %v223 = vld [vmem:[#allocation5 + $0x1f8] sm:$0xf]
    %v224 = vld [vmem:[#allocation5 + $0x1fc] sm:$0xf]
    %v225 = vld [vmem:[%s2] sm:$0x1]
    %v227 = vlaneseq
    %v228 = vshrl.u32 %v227, 7
    %v229 = vsub.s32 0, %v228
    %v230 = vrot.slane %v225, %v229
    %v360 = vunpack.c.l.b16 %v97
    %v361 = vunpack.c.l.b16 %v98
    %v362 = vunpack.c.l.b16 %v99
    %v363 = vunpack.c.l.b16 %v100
    %v364 = vunpack.c.l.b16 %v101
    %v365 = vunpack.c.l.b16 %v102
    %v366 = vunpack.c.l.b16 %v103
    %v367 = vunpack.c.l.b16 %v104
    %v368 = vunpack.c.l.b16 %v105
    %v369 = vunpack.c.l.b16 %v106
    %v370 = vunpack.c.l.b16 %v107
    %v371 = vunpack.c.l.b16 %v108
    %v372 = vunpack.c.l.b16 %v109
    %v373 = vunpack.c.l.b16 %v110
    %v374 = vunpack.c.l.b16 %v111
    %v375 = vunpack.c.l.b16 %v112
    %v376 = vunpack.c.l.b16 %v113
    %v377 = vunpack.c.l.b16 %v114
    %v378 = vunpack.c.l.b16 %v115
    %v379 = vunpack.c.l.b16 %v116
    %v380 = vunpack.c.l.b16 %v117
    %v381 = vunpack.c.l.b16 %v118
    %v382 = vunpack.c.l.b16 %v119
    %v383 = vunpack.c.l.b16 %v120
    %v384 = vunpack.c.l.b16 %v121
    %v385 = vunpack.c.l.b16 %v122
    %v386 = vunpack.c.l.b16 %v123
    %v387 = vunpack.c.l.b16 %v124
    %v388 = vunpack.c.l.b16 %v125
    %v389 = vunpack.c.l.b16 %v126
    %v390 = vunpack.c.l.b16 %v127
    %v391 = vunpack.c.l.b16 %v128
    %v392 = vunpack.c.l.b16 %v129
    %v393 = vunpack.c.l.b16 %v130
    %v394 = vunpack.c.l.b16 %v131
    %v395 = vunpack.c.l.b16 %v132
    %v396 = vunpack.c.l.b16 %v133
    %v397 = vunpack.c.l.b16 %v134
    %v398 = vunpack.c.l.b16 %v135
    %v399 = vunpack.c.l.b16 %v136
    %v400 = vunpack.c.l.b16 %v137
    %v401 = vunpack.c.l.b16 %v138
    %v402 = vunpack.c.l.b16 %v139
    %v403 = vunpack.c.l.b16 %v140
    %v404 = vunpack.c.l.b16 %v141
    %v405 = vunpack.c.l.b16 %v142
    %v406 = vunpack.c.l.b16 %v143
    %v407 = vunpack.c.l.b16 %v144
    %v408 = vunpack.c.l.b16 %v145
    %v409 = vunpack.c.l.b16 %v146
    %v410 = vunpack.c.l.b16 %v147
    %v411 = vunpack.c.l.b16 %v148
    %v412 = vunpack.c.l.b16 %v149
    %v413 = vunpack.c.l.b16 %v150
    %v414 = vunpack.c.l.b16 %v151
    %v415 = vunpack.c.l.b16 %v152
    %v416 = vunpack.c.l.b16 %v153
    %v417 = vunpack.c.l.b16 %v154
    %v418 = vunpack.c.l.b16 %v155
    %v419 = vunpack.c.l.b16 %v156
    %v420 = vunpack.c.l.b16 %v157
    %v421 = vunpack.c.l.b16 %v158
    %v422 = vunpack.c.l.b16 %v159
    %v423 = vunpack.c.l.b16 %v160
    %v424 = vunpack.c.l.b16 %v161
    %v425 = vunpack.c.l.b16 %v162
    %v426 = vunpack.c.l.b16 %v163
    %v427 = vunpack.c.l.b16 %v164
    %v428 = vunpack.c.l.b16 %v165
    %v429 = vunpack.c.l.b16 %v166
    %v430 = vunpack.c.l.b16 %v167
    %v431 = vunpack.c.l.b16 %v168
    %v432 = vunpack.c.l.b16 %v169
    %v433 = vunpack.c.l.b16 %v170
    %v434 = vunpack.c.l.b16 %v171
    %v435 = vunpack.c.l.b16 %v172
    %v436 = vunpack.c.l.b16 %v173
    %v437 = vunpack.c.l.b16 %v174
    %v438 = vunpack.c.l.b16 %v175
    %v439 = vunpack.c.l.b16 %v176
    %v440 = vunpack.c.l.b16 %v177
    %v441 = vunpack.c.l.b16 %v178
    %v442 = vunpack.c.l.b16 %v179
    %v443 = vunpack.c.l.b16 %v180
    %v444 = vunpack.c.l.b16 %v181
    %v445 = vunpack.c.l.b16 %v182
    %v446 = vunpack.c.l.b16 %v183
    %v447 = vunpack.c.l.b16 %v184
    %v448 = vunpack.c.l.b16 %v185
    %v449 = vunpack.c.l.b16 %v186
    %v450 = vunpack.c.l.b16 %v187
    %v451 = vunpack.c.l.b16 %v188
    %v452 = vunpack.c.l.b16 %v189
    %v453 = vunpack.c.l.b16 %v190
    %v454 = vunpack.c.l.b16 %v191
    %v455 = vunpack.c.l.b16 %v192
    %v456 = vunpack.c.l.b16 %v193
    %v457 = vunpack.c.l.b16 %v194
    %v458 = vunpack.c.l.b16 %v195
    %v459 = vunpack.c.l.b16 %v196
    %v460 = vunpack.c.l.b16 %v197
    %v461 = vunpack.c.l.b16 %v198
    %v462 = vunpack.c.l.b16 %v199
    %v463 = vunpack.c.l.b16 %v200
    %v464 = vunpack.c.l.b16 %v201
    %v465 = vunpack.c.l.b16 %v202
    %v466 = vunpack.c.l.b16 %v203
    %v467 = vunpack.c.l.b16 %v204
    %v468 = vunpack.c.l.b16 %v205
    %v469 = vunpack.c.l.b16 %v206
    %v470 = vunpack.c.l.b16 %v207
    %v471 = vunpack.c.l.b16 %v208
    %v472 = vunpack.c.l.b16 %v209
    %v473 = vunpack.c.l.b16 %v210
    %v474 = vunpack.c.l.b16 %v211
    %v475 = vunpack.c.l.b16 %v212
    %v476 = vunpack.c.l.b16 %v213
    %v477 = vunpack.c.l.b16 %v214
    %v478 = vunpack.c.l.b16 %v215
    %v479 = vunpack.c.l.b16 %v216
    %v480 = vunpack.c.l.b16 %v217
    %v481 = vunpack.c.l.b16 %v218
    %v482 = vunpack.c.l.b16 %v219
    %v483 = vunpack.c.l.b16 %v220
    %v484 = vunpack.c.l.b16 %v221
    %v485 = vunpack.c.l.b16 %v222
    %v486 = vunpack.c.l.b16 %v223
    %v487 = vunpack.c.l.b16 %v224
    %v488 = vpack.c.b16 %v361, %v360
    %v489 = vpack.c.b16 %v363, %v362
    %v490 = vpack.c.b16 %v365, %v364
    %v491 = vpack.c.b16 %v367, %v366
    %v492 = vpack.c.b16 %v369, %v368
    %v493 = vpack.c.b16 %v371, %v370
    %v494 = vpack.c.b16 %v373, %v372
    %v495 = vpack.c.b16 %v375, %v374
    %v496 = vpack.c.b16 %v377, %v376
    %v497 = vpack.c.b16 %v379, %v378
    %v498 = vpack.c.b16 %v381, %v380
    %v499 = vpack.c.b16 %v383, %v382
    %v500 = vpack.c.b16 %v385, %v384
    %v501 = vpack.c.b16 %v387, %v386
    %v502 = vpack.c.b16 %v389, %v388
    %v503 = vpack.c.b16 %v391, %v390
    %v504 = vpack.c.b16 %v393, %v392
    %v505 = vpack.c.b16 %v395, %v394
    %v506 = vpack.c.b16 %v397, %v396
    %v507 = vpack.c.b16 %v399, %v398
    %v508 = vpack.c.b16 %v401, %v400
    %v509 = vpack.c.b16 %v403, %v402
    %v510 = vpack.c.b16 %v405, %v404
    %v511 = vpack.c.b16 %v407, %v406
    %v512 = vpack.c.b16 %v409, %v408
    %v513 = vpack.c.b16 %v411, %v410
    %v514 = vpack.c.b16 %v413, %v412
    %v515 = vpack.c.b16 %v415, %v414
    %v516 = vpack.c.b16 %v417, %v416
    %v517 = vpack.c.b16 %v419, %v418
    %v518 = vpack.c.b16 %v421, %v420
    %v519 = vpack.c.b16 %v423, %v422
    %v520 = vpack.c.b16 %v425, %v424
    %v521 = vpack.c.b16 %v427, %v426
    %v522 = vpack.c.b16 %v429, %v428
    %v523 = vpack.c.b16 %v431, %v430
    %v524 = vpack.c.b16 %v433, %v432
    %v525 = vpack.c.b16 %v435, %v434
    %v526 = vpack.c.b16 %v437, %v436
    %v527 = vpack.c.b16 %v439, %v438
    %v528 = vpack.c.b16 %v441, %v440
    %v529 = vpack.c.b16 %v443, %v442
    %v530 = vpack.c.b16 %v445, %v444
    %v531 = vpack.c.b16 %v447, %v446
    %v532 = vpack.c.b16 %v449, %v448
    %v533 = vpack.c.b16 %v451, %v450
    %v534 = vpack.c.b16 %v453, %v452
    %v535 = vpack.c.b16 %v455, %v454
    %v536 = vpack.c.b16 %v457, %v456
    %v537 = vpack.c.b16 %v459, %v458
    %v538 = vpack.c.b16 %v461, %v460
    %v539 = vpack.c.b16 %v463, %v462
    %v540 = vpack.c.b16 %v465, %v464
    %v541 = vpack.c.b16 %v467, %v466
    %v542 = vpack.c.b16 %v469, %v468
    %v543 = vpack.c.b16 %v471, %v470
    %v544 = vpack.c.b16 %v473, %v472
    %v545 = vpack.c.b16 %v475, %v474
    %v546 = vpack.c.b16 %v477, %v476
    %v547 = vpack.c.b16 %v479, %v478
    %v548 = vpack.c.b16 %v481, %v480
    %v549 = vpack.c.b16 %v483, %v482
    %v550 = vpack.c.b16 %v485, %v484
    %v551 = vpack.c.b16 %v487, %v486
    %616 = vmatprep.subr.bf16.mxu0 0
    %617 = vmatpush1.bf16.msra.mxu0 %v488
    %618 = vmatprep.subr.bf16.mxu0 0
    %619 = vmatpush1.bf16.msra.mxu0 %v489
    %620 = vmatprep.subr.bf16.mxu0 0
    %621 = vmatpush1.bf16.msra.mxu0 %v490
    %622 = vmatprep.subr.bf16.mxu0 0
    %623 = vmatpush1.bf16.msra.mxu0 %v491
    %624 = vmatprep.subr.bf16.mxu0 0
    %625 = vmatpush1.bf16.msra.mxu0 %v492
    %626 = vmatprep.subr.bf16.mxu0 0
    %627 = vmatpush1.bf16.msra.mxu0 %v493
    %628 = vmatprep.subr.bf16.mxu0 0
    %629 = vmatpush1.bf16.msra.mxu0 %v494
    %630 = vmatprep.subr.bf16.mxu0 0
    %631 = vmatpush1.bf16.msra.mxu0 %v495
    %632 = vmatprep.subr.bf16.mxu0 0
    %633 = vmatpush1.bf16.msra.mxu0 %v496
    %634 = vmatprep.subr.bf16.mxu0 0
    %635 = vmatpush1.bf16.msra.mxu0 %v497
    %636 = vmatprep.subr.bf16.mxu0 0
    %637 = vmatpush1.bf16.msra.mxu0 %v498
    %638 = vmatprep.subr.bf16.mxu0 0
    %639 = vmatpush1.bf16.msra.mxu0 %v499
    %640 = vmatprep.subr.bf16.mxu0 0
    %641 = vmatpush1.bf16.msra.mxu0 %v500
    %642 = vmatprep.subr.bf16.mxu0 0
    %643 = vmatpush1.bf16.msra.mxu0 %v501
    %644 = vmatprep.subr.bf16.mxu0 0
    %645 = vmatpush1.bf16.msra.mxu0 %v502
    %646 = vmatprep.subr.bf16.mxu0 0
    %647 = vmatpush1.bf16.msra.mxu0 %v503
    %648 = vmatprep.mubr.bf16.mxu0 %v90
    %649 = vmatmul.mubr.bf16.gmra.mrb[0].mxu0 %v89
    %v650 = vpop.f32.mrb[0].mxu0
    %v651 = vadd.f32 %v230, %v650
    %v652 = vpop.f32.mrb[0].mxu0
    %v653 = vpop.f32.mrb[0].mxu0
    %v654 = vpop.f32.mrb[0].mxu0
    %655 = vdwg.mxu0
    %656 = vmatprep.subr.bf16.mxu0 0
    %657 = vmatpush1.bf16.msra.mxu0 %v504
    %658 = vmatprep.subr.bf16.mxu0 0
    %659 = vmatpush1.bf16.msra.mxu0 %v505
    %660 = vmatprep.subr.bf16.mxu0 0
    %661 = vmatpush1.bf16.msra.mxu0 %v506
    %662 = vmatprep.subr.bf16.mxu0 0
    %663 = vmatpush1.bf16.msra.mxu0 %v507
    %664 = vmatprep.subr.bf16.mxu0 0
    %665 = vmatpush1.bf16.msra.mxu0 %v508
    %666 = vmatprep.subr.bf16.mxu0 0
    %667 = vmatpush1.bf16.msra.mxu0 %v509
    %668 = vmatprep.subr.bf16.mxu0 0
    %669 = vmatpush1.bf16.msra.mxu0 %v510
    %670 = vmatprep.subr.bf16.mxu0 0
    %671 = vmatpush1.bf16.msra.mxu0 %v511
    %672 = vmatprep.subr.bf16.mxu0 0
    %673 = vmatpush1.bf16.msra.mxu0 %v512
    %674 = vmatprep.subr.bf16.mxu0 0
    %675 = vmatpush1.bf16.msra.mxu0 %v513
    %676 = vmatprep.subr.bf16.mxu0 0
    %677 = vmatpush1.bf16.msra.mxu0 %v514
    %678 = vmatprep.subr.bf16.mxu0 0
    %679 = vmatpush1.bf16.msra.mxu0 %v515
    %680 = vmatprep.subr.bf16.mxu0 0
    %681 = vmatpush1.bf16.msra.mxu0 %v516
    %682 = vmatprep.subr.bf16.mxu0 0
    %683 = vmatpush1.bf16.msra.mxu0 %v517
    %684 = vmatprep.subr.bf16.mxu0 0
    %685 = vmatpush1.bf16.msra.mxu0 %v518
    %686 = vmatprep.subr.bf16.mxu0 0
    %687 = vmatpush1.bf16.msra.mxu0 %v519
    %688 = vmatprep.mubr.bf16.mxu0 %v92
    %689 = vmatmul.mubr.bf16.gmra.mrb[0].mxu0 %v91
    %v690 = vpop.f32.mrb[0].mxu0
    %v691 = vadd.f32 %v651, %v690
    %v692 = vpop.f32.mrb[0].mxu0
    %v693 = vpop.f32.mrb[0].mxu0
    %v694 = vpop.f32.mrb[0].mxu0
    %695 = vdwg.mxu0
    %696 = vmatprep.subr.bf16.mxu0 0
    %697 = vmatpush1.bf16.msra.mxu0 %v520
    %698 = vmatprep.subr.bf16.mxu0 0
    %699 = vmatpush1.bf16.msra.mxu0 %v521
    %700 = vmatprep.subr.bf16.mxu0 0
    %701 = vmatpush1.bf16.msra.mxu0 %v522
    %702 = vmatprep.subr.bf16.mxu0 0
    %703 = vmatpush1.bf16.msra.mxu0 %v523
    %704 = vmatprep.subr.bf16.mxu0 0
    %705 = vmatpush1.bf16.msra.mxu0 %v524
    %706 = vmatprep.subr.bf16.mxu0 0
    %707 = vmatpush1.bf16.msra.mxu0 %v525
    %708 = vmatprep.subr.bf16.mxu0 0
    %709 = vmatpush1.bf16.msra.mxu0 %v526
    %710 = vmatprep.subr.bf16.mxu0 0
    %711 = vmatpush1.bf16.msra.mxu0 %v527
    %712 = vmatprep.subr.bf16.mxu0 0
    %713 = vmatpush1.bf16.msra.mxu0 %v528
    %714 = vmatprep.subr.bf16.mxu0 0
    %715 = vmatpush1.bf16.msra.mxu0 %v529
    %716 = vmatprep.subr.bf16.mxu0 0
    %717 = vmatpush1.bf16.msra.mxu0 %v530
    %718 = vmatprep.subr.bf16.mxu0 0
    %719 = vmatpush1.bf16.msra.mxu0 %v531
    %720 = vmatprep.subr.bf16.mxu0 0
    %721 = vmatpush1.bf16.msra.mxu0 %v532
    %722 = vmatprep.subr.bf16.mxu0 0
    %723 = vmatpush1.bf16.msra.mxu0 %v533
    %724 = vmatprep.subr.bf16.mxu0 0
    %725 = vmatpush1.bf16.msra.mxu0 %v534
    %726 = vmatprep.subr.bf16.mxu0 0
    %727 = vmatpush1.bf16.msra.mxu0 %v535
    %728 = vmatprep.mubr.bf16.mxu0 %v94
    %729 = vmatmul.mubr.bf16.gmra.mrb[0].mxu0 %v93
    %v730 = vpop.f32.mrb[0].mxu0
    %v731 = vadd.f32 %v691, %v730
    %v732 = vpop.f32.mrb[0].mxu0
    %v733 = vpop.f32.mrb[0].mxu0
    %v734 = vpop.f32.mrb[0].mxu0
    %735 = vdwg.mxu0
    %736 = vmatprep.subr.bf16.mxu0 0
    %737 = vmatpush1.bf16.msra.mxu0 %v536
    %738 = vmatprep.subr.bf16.mxu0 0
    %739 = vmatpush1.bf16.msra.mxu0 %v537
    %740 = vmatprep.subr.bf16.mxu0 0
    %741 = vmatpush1.bf16.msra.mxu0 %v538
    %742 = vmatprep.subr.bf16.mxu0 0
    %743 = vmatpush1.bf16.msra.mxu0 %v539
    %744 = vmatprep.subr.bf16.mxu0 0
    %745 = vmatpush1.bf16.msra.mxu0 %v540
    %746 = vmatprep.subr.bf16.mxu0 0
    %747 = vmatpush1.bf16.msra.mxu0 %v541
    %748 = vmatprep.subr.bf16.mxu0 0
    %749 = vmatpush1.bf16.msra.mxu0 %v542
    %750 = vmatprep.subr.bf16.mxu0 0
    %751 = vmatpush1.bf16.msra.mxu0 %v543
    %752 = vmatprep.subr.bf16.mxu0 0
    %753 = vmatpush1.bf16.msra.mxu0 %v544
    %754 = vmatprep.subr.bf16.mxu0 0
    %755 = vmatpush1.bf16.msra.mxu0 %v545
    %756 = vmatprep.subr.bf16.mxu0 0
    %757 = vmatpush1.bf16.msra.mxu0 %v546
    %758 = vmatprep.subr.bf16.mxu0 0
    %759 = vmatpush1.bf16.msra.mxu0 %v547
    %760 = vmatprep.subr.bf16.mxu0 0
    %761 = vmatpush1.bf16.msra.mxu0 %v548
    %762 = vmatprep.subr.bf16.mxu0 0
    %763 = vmatpush1.bf16.msra.mxu0 %v549
    %764 = vmatprep.subr.bf16.mxu0 0
    %765 = vmatpush1.bf16.msra.mxu0 %v550
    %766 = vmatprep.subr.bf16.mxu0 0
    %767 = vmatpush1.bf16.msra.mxu0 %v551
    %768 = vmatprep.mubr.bf16.mxu0 %v96
    %769 = vmatmul.mubr.bf16.gmra.mrb[0].mxu0 %v95
    %v770 = vpop.f32.mrb[0].mxu0
    %v771 = vadd.f32 %v731, %v770
    %v772 = vpop.f32.mrb[0].mxu0
    %v773 = vpop.f32.mrb[0].mxu0
    %v774 = vpop.f32.mrb[0].mxu0
    %775 = vdwg.mxu0
    %v776 = vmax.f32 %v771, 0.0
    %v777 = vpack.c.bf16 %v776, %v776
    %v778 = vld [vmem:[#allocation7] sm:$0xf]
    %v779 = vld [vmem:[#allocation7 + $0x4] sm:$0xf]
    %v780 = vld [vmem:[#allocation7 + $0x8] sm:$0xf]
    %v781 = vld [vmem:[#allocation7 + $0xc] sm:$0xf]
    %v782 = vld [vmem:[#allocation7 + $0x10] sm:$0xf]
    %v783 = vld [vmem:[#allocation7 + $0x14] sm:$0xf]
    %v784 = vld [vmem:[#allocation7 + $0x18] sm:$0xf]
    %v785 = vld [vmem:[#allocation7 + $0x1c] sm:$0xf]
    %v786 = vld [vmem:[#allocation7 + $0x20] sm:$0xf]
    %v787 = vld [vmem:[#allocation7 + $0x24] sm:$0xf]
    %v788 = vld [vmem:[#allocation7 + $0x28] sm:$0xf]
    %v789 = vld [vmem:[#allocation7 + $0x2c] sm:$0xf]
    %v790 = vld [vmem:[#allocation7 + $0x30] sm:$0xf]
    %v791 = vld [vmem:[#allocation7 + $0x34] sm:$0xf]
    %v792 = vld [vmem:[#allocation7 + $0x38] sm:$0xf]
    %v793 = vld [vmem:[#allocation7 + $0x3c] sm:$0xf]
    %v794 = vld [vmem:[%s4] sm:$0x1]
    %v796 = vlaneseq
    %v797 = vshrl.u32 %v796, 7
    %v798 = vsub.s32 0, %v797
    %v799 = vrot.slane %v794, %v798
    %v817 = vunpack.c.l.b16 %v778
    %v818 = vunpack.c.l.b16 %v779
    %v819 = vunpack.c.l.b16 %v780
    %v820 = vunpack.c.l.b16 %v781
    %v821 = vunpack.c.l.b16 %v782
    %v822 = vunpack.c.l.b16 %v783
    %v823 = vunpack.c.l.b16 %v784
    %v824 = vunpack.c.l.b16 %v785
    %v825 = vunpack.c.l.b16 %v786
    %v826 = vunpack.c.l.b16 %v787
    %v827 = vunpack.c.l.b16 %v788
    %v828 = vunpack.c.l.b16 %v789
    %v829 = vunpack.c.l.b16 %v790
    %v830 = vunpack.c.l.b16 %v791
    %v831 = vunpack.c.l.b16 %v792
    %v832 = vunpack.c.l.b16 %v793
    %v833 = vpack.c.b16 %v818, %v817
    %v834 = vpack.c.b16 %v820, %v819
    %v835 = vpack.c.b16 %v822, %v821
    %v836 = vpack.c.b16 %v824, %v823
    %v837 = vpack.c.b16 %v826, %v825
    %v838 = vpack.c.b16 %v828, %v827
    %v839 = vpack.c.b16 %v830, %v829
    %v840 = vpack.c.b16 %v832, %v831
    %849 = vmatprep.subr.bf16.mxu0 0
    %850 = vmatpush1.bf16.msra.mxu0 %v833
    %851 = vmatprep.subr.bf16.mxu0 0
    %852 = vmatpush1.bf16.msra.mxu0 %v834
    %853 = vmatprep.subr.bf16.mxu0 0
    %854 = vmatpush1.bf16.msra.mxu0 %v835
    %855 = vmatprep.subr.bf16.mxu0 0
    %856 = vmatpush1.bf16.msra.mxu0 %v836
    %857 = vmatprep.subr.bf16.mxu0 0
    %858 = vmatpush1.bf16.msra.mxu0 %v837
    %859 = vmatprep.subr.bf16.mxu0 0
    %860 = vmatpush1.bf16.msra.mxu0 %v838
    %861 = vmatprep.subr.bf16.mxu0 0
    %862 = vmatpush1.bf16.msra.mxu0 %v839
    %863 = vmatprep.subr.bf16.mxu0 0
    %864 = vmatpush1.bf16.msra.mxu0 %v840
    %865 = vmatprep.subr.bf16.mxu0 0
    %866 = vmatpush1.bf16.msra.mxu0 0
    %867 = vmatprep.subr.bf16.mxu0 0
    %868 = vmatpush1.bf16.msra.mxu0 0
    %869 = vmatprep.subr.bf16.mxu0 0
    %870 = vmatpush1.bf16.msra.mxu0 0
    %871 = vmatprep.subr.bf16.mxu0 0
    %872 = vmatpush1.bf16.msra.mxu0 0
    %873 = vmatprep.subr.bf16.mxu0 0
    %874 = vmatpush1.bf16.msra.mxu0 0
    %875 = vmatprep.subr.bf16.mxu0 0
    %876 = vmatpush1.bf16.msra.mxu0 0
    %877 = vmatprep.subr.bf16.mxu0 0
    %878 = vmatpush1.bf16.msra.mxu0 0
    %879 = vmatprep.subr.bf16.mxu0 0
    %880 = vmatpush1.bf16.msra.mxu0 0
    %881 = vmatprep.mubr.bf16.mxu0 0
    %882 = vmatmul.mubr.bf16.gmra.mrb[0].mxu0 %v777
    %v883 = vpop.f32.mrb[0].mxu0
    %v884 = vadd.f32 %v799, %v883
    %v885 = vpop.f32.mrb[0].mxu0
    %v886 = vpop.f32.mrb[0].mxu0
    %v887 = vpop.f32.mrb[0].mxu0
    %888 = vdwg.mxu0
    %v889 = vmax.f32 %v884, 0.0
    %v890 = vpack.c.bf16 %v889, %v889
    %v891 = vld [vmem:[#allocation8] sm:$0xf]
    %v892 = vld [vmem:[#allocation8 + $0x4] sm:$0xf]
    %v893 = vld [vmem:[#allocation8 + $0x8] sm:$0xf]
    %v894 = vld [vmem:[#allocation8 + $0xc] sm:$0xf]
    %v895 = vld [vmem:[#allocation8 + $0x10] sm:$0xf]
    %v896 = vld [vmem:[#allocation8 + $0x14] sm:$0xf]
    %v897 = vld [vmem:[#allocation8 + $0x18] sm:$0xf]
    %v898 = vld [vmem:[#allocation8 + $0x1c] sm:$0xf]
    %v899 = vld [vmem:[#allocation8 + $0x20] sm:$0xf]
    %v900 = vld [vmem:[#allocation8 + $0x24] sm:$0xf]
    %v901 = vld [vmem:[#allocation8 + $0x28] sm:$0xf]
    %v902 = vld [vmem:[#allocation8 + $0x2c] sm:$0xf]
    %v903 = vld [vmem:[#allocation8 + $0x30] sm:$0xf]
    %v904 = vld [vmem:[#allocation8 + $0x34] sm:$0xf]
    %v905 = vld [vmem:[#allocation8 + $0x38] sm:$0xf]
    %v906 = vld [vmem:[#allocation8 + $0x3c] sm:$0xf]
    %v907 = vld [vmem:[%s6] sm:$0x1]
    %v909 = vlaneseq
    %v910 = vshrl.u32 %v909, 7
    %v911 = vsub.s32 0, %v910
    %v912 = vrot.slane %v907, %v911
    %v930 = vunpack.c.l.b16 %v891
    %v931 = vunpack.c.l.b16 %v892
    %v932 = vunpack.c.l.b16 %v893
    %v933 = vunpack.c.l.b16 %v894
    %v934 = vunpack.c.l.b16 %v895
    %v935 = vunpack.c.l.b16 %v896
    %v936 = vunpack.c.l.b16 %v897
    %v937 = vunpack.c.l.b16 %v898
    %v938 = vunpack.c.l.b16 %v899
    %v939 = vunpack.c.l.b16 %v900
    %v940 = vunpack.c.l.b16 %v901
    %v941 = vunpack.c.l.b16 %v902
    %v942 = vunpack.c.l.b16 %v903
    %v943 = vunpack.c.l.b16 %v904
    %v944 = vunpack.c.l.b16 %v905
    %v945 = vunpack.c.l.b16 %v906
    %v946 = vpack.c.b16 %v931, %v930
    %v947 = vpack.c.b16 %v933, %v932
    %v948 = vpack.c.b16 %v935, %v934
    %v949 = vpack.c.b16 %v937, %v936
    %v950 = vpack.c.b16 %v939, %v938
    %v951 = vpack.c.b16 %v941, %v940
    %v952 = vpack.c.b16 %v943, %v942
    %v953 = vpack.c.b16 %v945, %v944
    %962 = vmatprep.subr.bf16.mxu0 0
    %963 = vmatpush1.bf16.msra.mxu0 %v946
    %964 = vmatprep.subr.bf16.mxu0 0
    %965 = vmatpush1.bf16.msra.mxu0 %v947
    %966 = vmatprep.subr.bf16.mxu0 0
    %967 = vmatpush1.bf16.msra.mxu0 %v948
    %968 = vmatprep.subr.bf16.mxu0 0
    %969 = vmatpush1.bf16.msra.mxu0 %v949
    %970 = vmatprep.subr.bf16.mxu0 0
    %971 = vmatpush1.bf16.msra.mxu0 %v950
    %972 = vmatprep.subr.bf16.mxu0 0
    %973 = vmatpush1.bf16.msra.mxu0 %v951
    %974 = vmatprep.subr.bf16.mxu0 0
    %975 = vmatpush1.bf16.msra.mxu0 %v952
    %976 = vmatprep.subr.bf16.mxu0 0
    %977 = vmatpush1.bf16.msra.mxu0 %v953
    %978 = vmatprep.subr.bf16.mxu0 0
    %979 = vmatpush1.bf16.msra.mxu0 0
    %980 = vmatprep.subr.bf16.mxu0 0
    %981 = vmatpush1.bf16.msra.mxu0 0
    %982 = vmatprep.subr.bf16.mxu0 0
    %983 = vmatpush1.bf16.msra.mxu0 0
    %984 = vmatprep.subr.bf16.mxu0 0
    %985 = vmatpush1.bf16.msra.mxu0 0
    %986 = vmatprep.subr.bf16.mxu0 0
    %987 = vmatpush1.bf16.msra.mxu0 0
    %988 = vmatprep.subr.bf16.mxu0 0
    %989 = vmatpush1.bf16.msra.mxu0 0
    %990 = vmatprep.subr.bf16.mxu0 0
    %991 = vmatpush1.bf16.msra.mxu0 0
    %992 = vmatprep.subr.bf16.mxu0 0
    %993 = vmatpush1.bf16.msra.mxu0 0
    %994 = vmatprep.mubr.bf16.mxu0 0
    %995 = vmatmul.mubr.bf16.gmra.mrb[0].mxu0 %v890
    %v996 = vpop.f32.mrb[0].mxu0
    %v997 = vadd.f32 %v912, %v996
    %v998 = vpop.f32.mrb[0].mxu0
    %v999 = vpop.f32.mrb[0].mxu0
    %v1000 = vpop.f32.mrb[0].mxu0
    %1001 = vdwg.mxu0
    %v1002 = vmax.f32 %v997, 0.0
    %v1003 = vand.u32 2147483647, %v997
    %v1004 = vsub.f32 0.0, %v1003
    %v1005 = vmul.f32 %v1004, 1.442695
    %v1006 = vpow.pop %v1005
    %v1007 = vadd.f32 %v1006, 1.0
    %v1008 = vlog2.pop %v1007
    %v1009 = vmul.f32 %v1008, 0.6931472
    %v1010 = vmul.f32 -0.5, %v1006
    %v1011 = vadd.f32 %v1010, 1.0
    %v1012 = vmul.f32 %v1011, %v1006
    %v1013 = vand.u32 2147483647, %v1006
    %vm1014 = vcmp.lt.f32.partialorder %v1013, 0.0004427343
    %v1015 = vsel %vm1014, %v1012, %v1009
    %v1016 = vadd.f32 %v1002, %v1015
    %v1017 = vadd.f32 %v1016, 1e-05
    %v1018 = vlaneseq
    %v1019 = vand.u32 %v1018, 127
    %vm1020 = vcmp.ge.s32.totalorder %v1019, 8
    %vm1021 = vcmp.lt.s32.totalorder %v1019, 16
    %vm1022 = vmand %vm1020, %vm1021
    %v1023 = vsel %vm1022, 1, 0
    %vm1024 = vcmp.eq.s32.totalorder %v1023, 1
    %v1025 = vsel %vm1024, %v1017, %v997
    %1026 = vst [vmem:[#allocation10] sm:$0xff] %v1025
    // Predicated region
    $region46: #{tpu_custom_call.1} parent=1 // pred_check
      _
    $region47: #{tpu_custom_call.1} parent=1 // pred_check_branch
      %1028 = sbr.rel (0) target = $region49
    $region48: #{tpu_custom_call.1} parent=1 // pred_region
      %s1030 = ssub.s32 128, 128
      %1031 = vsyncadd [#allocation4], %s1030
      %s1033 = sshll.u32 [#allocation10], 4
      %s1034 = int_to_ptr.vmem [resolvable:$true] %s1033
      %1036 = dma.vmem_to_hbm [thread:$0]  %s1034, 128, %s7, [#allocation4]
    $region49: #{tpu_custom_call.1} parent=1 // pred_fallthru
      _
    // Predicated region
    $region50: #{tpu_custom_call.1} parent=1 // pred_check
      _
    $region51: #{tpu_custom_call.1} parent=1 // pred_check_branch
      %1038 = sbr.rel (0) target = $region53
    $region52: #{tpu_custom_call.1} parent=1 // pred_region
      %1039 = dma.done [#allocation4], 128
    $region53: #{tpu_custom_call.1} parent=1 // pred_fallthru
      _
    %1040 = vsyncpa [#allocation3], 1
    %1041 = vsyncpa [#allocation6], 1
    %1042 = vsyncpa [#allocation9], 1
    %1043 = vsyncpa [#allocation4], 1

// kernel: tpu_custom_call.1
$region0: #{tpu_custom_call.1}
  #allocation0 [shape = 'u32[]', space=smem, size = 0x4, offset = 0x4, fixed_abs, tag = 'smem constant byte address 0x4 - core index']
  #allocation1 [shape = 'u32[144,128]{1,0:T(1,128)}', space=vmem, size = 0x12000, scoped, tag = 'internal scratch']
  %s0 = inlined_call_operand.hbm [shape: f32[8,1024], index: 0, kind: input, shape index: {}]
  %s1 = inlined_call_operand.hbm [shape: bf16[1024,128], index: 1, kind: input, shape index: {}]
  %s2 = inlined_call_operand.vmem [shape: f32[1,128], index: 2, kind: input, shape index: {}]
  %s3 = inlined_call_operand.hbm [shape: bf16[128,128], index: 3, kind: input, shape index: {}]
  %s4 = inlined_call_operand.vmem [shape: f32[1,128], index: 4, kind: input, shape index: {}]
  %s5 = inlined_call_operand.hbm [shape: bf16[128,128], index: 5, kind: input, shape index: {}]
  %s6 = inlined_call_operand.vmem [shape: f32[1,128], index: 6, kind: input, shape index: {}]
  %s7 = inlined_call_operand.hbm [shape: f32[8,128], index: 7, kind: output, shape index: {}]
  %s8 = sld [smem:[#allocation0]]
  $region54: #{tpu_custom_call.1} parent=0
    _
  %s10 = ssub.s32 1, %s8
  %s11 = scalar_select 0, %s10, %s8
  $region1: #{tpu_custom_call.1} parent=0
    #allocation2 [shape = 'u8[32768]{0}', space=vmem, size = 0x8000, scoped, tag = 'input window, operand 0, single buffered']
    #allocation3 [shape = 's32[1]{0}', space=sflag, size = 0x4, scoped, tag = 'scoped memory for tpu_custom_call.1']
    #allocation4 [shape = 's32[1]{0}', space=sflag, size = 0x4, scoped, tag = 'scoped memory for tpu_custom_call.1']
    #allocation5 [shape = 'u8[262144]{0}', space=vmem, size = 0x40000, scoped, tag = 'input window, operand 1, single buffered']
    #allocation6 [shape = 's32[1]{0}', space=sflag, size = 0x4, scoped, tag = 'scoped memory for tpu_custom_call.1']
    #allocation7 [shape = 'u8[32768]{0}', space=vmem, size = 0x8000, scoped, tag = 'input window, operand 3, single buffered']
    #allocation8 [shape = 'u8[32768]{0}', space=vmem, size = 0x8000, scoped, tag = 'input window, operand 5, single buffered']
    #allocation9 [shape = 's32[1]{0}', space=sflag, size = 0x4, scoped, tag = 'scoped memory for tpu_custom_call.1']
    #allocation10 [shape = 'u8[4096]{0}', space=vmem, size = 0x1000, scoped, tag = 'output window, operand 0, single buffered']
    %12 = vsyncpa [#allocation3], 0
    %13 = vsyncpa [#allocation6], 0
    %14 = vsyncpa [#allocation9], 0
    %15 = vsyncpa [#allocation4], 0
    // Predicated region
    $region2: #{tpu_custom_call.1} parent=1 // pred_check
      _
    $region3: #{tpu_custom_call.1} parent=1 // pred_check_branch
      %17 = sbr.rel (0) target = $region5
    $region4: #{tpu_custom_call.1} parent=1 // pred_region
      %s19 = ssub.s32 1024, 1024
      %20 = vsyncadd [#allocation3], %s19
      %s22 = sshll.u32 [#allocation2], 4
      %s23 = int_to_ptr.vmem [resolvable:$true] %s22
      %25 = dma.hbm_to_vmem [thread:$0]  %s0, 1024, %s23, [#allocation3]
    $region5: #{tpu_custom_call.1} parent=1 // pred_fallthru
      _
    // Predicated region
    $region6: #{tpu_custom_call.1} parent=1 // pred_check
      _
    $region7: #{tpu_custom_call.1} parent=1 // pred_check_branch
      %27 = sbr.rel (0) target = $region9
    $region8: #{tpu_custom_call.1} parent=1 // pred_region
      %s29 = ssub.s32 8192, 8192
      %30 = vsyncadd [#allocation6], %s29
      %s31 = sshll.u32 [#allocation5], 4
      %s32 = int_to_ptr.vmem [resolvable:$true] %s31
      %37 = dma.hbm_to_vmem [thread:$0]  %s1, 8192, %s32, [#allocation6], 64, 64, 4
    $region9: #{tpu_custom_call.1} parent=1 // pred_fallthru
      _
    // Predicated region
    $region10: #{tpu_custom_call.1} parent=1 // pred_check
      _
    $region11: #{tpu_custom_call.1} parent=1 // pred_check_branch
      %39 = sbr.rel (0) target = $region13
    $region12: #{tpu_custom_call.1} parent=1 // pred_region
      _
    $region13: #{tpu_custom_call.1} parent=1 // pred_fallthru
      _
    // Predicated region
    $region14: #{tpu_custom_call.1} parent=1 // pred_check
      _
    $region15: #{tpu_custom_call.1} parent=1 // pred_check_branch
      %41 = sbr.rel (0) target = $region17
    $region16: #{tpu_custom_call.1} parent=1 // pred_region
      %s43 = ssub.s32 1024, 1024
      %44 = vsyncadd [#allocation6], %s43
      %s45 = sshll.u32 [#allocation7], 4
      %s46 = int_to_ptr.vmem [resolvable:$true] %s45
      %51 = dma.hbm_to_vmem [thread:$0]  %s3, 1024, %s46, [#allocation6], 64, 64, 4
    $region17: #{tpu_custom_call.1} parent=1 // pred_fallthru
      _
    // Predicated region
    $region18: #{tpu_custom_call.1} parent=1 // pred_check
      _
    $region19: #{tpu_custom_call.1} parent=1 // pred_check_branch
      %53 = sbr.rel (0) target = $region21
    $region20: #{tpu_custom_call.1} parent=1 // pred_region
      _
    $region21: #{tpu_custom_call.1} parent=1 // pred_fallthru
      _
    // Predicated region
    $region22: #{tpu_custom_call.1} parent=1 // pred_check
      _
    $region23: #{tpu_custom_call.1} parent=1 // pred_check_branch
      %55 = sbr.rel (0) target = $region25
    $region24: #{tpu_custom_call.1} parent=1 // pred_region
      %s57 = ssub.s32 1024, 1024
      %58 = vsyncadd [#allocation9], %s57
      %s59 = sshll.u32 [#allocation8], 4
      %s60 = int_to_ptr.vmem [resolvable:$true] %s59
      %65 = dma.hbm_to_vmem [thread:$0]  %s5, 1024, %s60, [#allocation9], 64, 64, 4
    $region25: #{tpu_custom_call.1} parent=1 // pred_fallthru
      _
    // Predicated region
    $region26: #{tpu_custom_call.1} parent=1 // pred_check
      _
    $region27: #{tpu_custom_call.1} parent=1 // pred_check_branch
      %67 = sbr.rel (0) target = $region29
    $region28: #{tpu_custom_call.1} parent=1 // pred_region
      _
    $region29: #{tpu_custom_call.1} parent=1 // pred_fallthru
      _
    // Predicated region
    $region30: #{tpu_custom_call.1} parent=1 // pred_check
      _
    $region31: #{tpu_custom_call.1} parent=1 // pred_check_branch
      %69 = sbr.rel (0) target = $region33
    $region32: #{tpu_custom_call.1} parent=1 // pred_region
      %70 = dma.done [#allocation3], 1024
    $region33: #{tpu_custom_call.1} parent=1 // pred_fallthru
      _
    // Predicated region
    $region34: #{tpu_custom_call.1} parent=1 // pred_check
      _
    $region35: #{tpu_custom_call.1} parent=1 // pred_check_branch
      %72 = sbr.rel (0) target = $region37
    $region36: #{tpu_custom_call.1} parent=1 // pred_region
      %73 = dma.done [#allocation6], 8192
    $region37: #{tpu_custom_call.1} parent=1 // pred_fallthru
      _
    // Predicated region
    $region38: #{tpu_custom_call.1} parent=1 // pred_check
      _
    $region39: #{tpu_custom_call.1} parent=1 // pred_check_branch
      %75 = sbr.rel (0) target = $region41
    $region40: #{tpu_custom_call.1} parent=1 // pred_region
      %76 = dma.done [#allocation6], 1024
    $region41: #{tpu_custom_call.1} parent=1 // pred_fallthru
      _
    // Predicated region
    $region42: #{tpu_custom_call.1} parent=1 // pred_check
      _
    $region43: #{tpu_custom_call.1} parent=1 // pred_check_branch
      %78 = sbr.rel (0) target = $region45
    $region44: #{tpu_custom_call.1} parent=1 // pred_region
      %79 = dma.done [#allocation9], 1024
    $region45: #{tpu_custom_call.1} parent=1 // pred_fallthru
      _
    %v81 = vld [vmem:[#allocation2] sm:$0xff]
    %v82 = vld [vmem:[#allocation2 + $0x8] sm:$0xff]
    %v83 = vld [vmem:[#allocation2 + $0x10] sm:$0xff]
    %v84 = vld [vmem:[#allocation2 + $0x18] sm:$0xff]
    %v85 = vld [vmem:[#allocation2 + $0x20] sm:$0xff]
    %v86 = vld [vmem:[#allocation2 + $0x28] sm:$0xff]
    %v87 = vld [vmem:[#allocation2 + $0x30] sm:$0xff]
    %v88 = vld [vmem:[#allocation2 + $0x38] sm:$0xff]
    %v89 = vpack.c.bf16 %v81, %v81
    %v90 = vpack.c.bf16 %v82, %v82
    %v91 = vpack.c.bf16 %v83, %v83
    %v92 = vpack.c.bf16 %v84, %v84
    %v93 = vpack.c.bf16 %v85, %v85
    %v94 = vpack.c.bf16 %v86, %v86
    %v95 = vpack.c.bf16 %v87, %v87
    %v96 = vpack.c.bf16 %v88, %v88
    %v97 = vld [vmem:[#allocation5] sm:$0xf]
    %v98 = vld [vmem:[#allocation5 + $0x4] sm:$0xf]
    %v99 = vld [vmem:[#allocation5 + $0x8] sm:$0xf]
    %v100 = vld [vmem:[#allocation5 + $0xc] sm:$0xf]
    %v101 = vld [vmem:[#allocation5 + $0x10] sm:$0xf]
    %v102 = vld [vmem:[#allocation5 + $0x14] sm:$0xf]
    %v103 = vld [vmem:[#allocation5 + $0x18] sm:$0xf]
    %v104 = vld [vmem:[#allocation5 + $0x1c] sm:$0xf]
    %v105 = vld [vmem:[#allocation5 + $0x20] sm:$0xf]
    %v106 = vld [vmem:[#allocation5 + $0x24] sm:$0xf]
    %v107 = vld [vmem:[#allocation5 + $0x28] sm:$0xf]
    %v108 = vld [vmem:[#allocation5 + $0x2c] sm:$0xf]
    %v109 = vld [vmem:[#allocation5 + $0x30] sm:$0xf]
    %v110 = vld [vmem:[#allocation5 + $0x34] sm:$0xf]
    %v111 = vld [vmem:[#allocation5 + $0x38] sm:$0xf]
    %v112 = vld [vmem:[#allocation5 + $0x3c] sm:$0xf]
    %v113 = vld [vmem:[#allocation5 + $0x40] sm:$0xf]
    %v114 = vld [vmem:[#allocation5 + $0x44] sm:$0xf]
    %v115 = vld [vmem:[#allocation5 + $0x48] sm:$0xf]
    %v116 = vld [vmem:[#allocation5 + $0x4c] sm:$0xf]
    %v117 = vld [vmem:[#allocation5 + $0x50] sm:$0xf]
    %v118 = vld [vmem:[#allocation5 + $0x54] sm:$0xf]
    %v119 = vld [vmem:[#allocation5 + $0x58] sm:$0xf]
    %v120 = vld [vmem:[#allocation5 + $0x5c] sm:$0xf]
    %v121 = vld [vmem:[#allocation5 + $0x60] sm:$0xf]
    %v122 = vld [vmem:[#allocation5 + $0x64] sm:$0xf]
    %v123 = vld [vmem:[#allocation5 + $0x68] sm:$0xf]
    %v124 = vld [vmem:[#allocation5 + $0x6c] sm:$0xf]
    %v125 = vld [vmem:[#allocation5 + $0x70] sm:$0xf]
    %v126 = vld [vmem:[#allocation5 + $0x74] sm:$0xf]
    %v127 = vld [vmem:[#allocation5 + $0x78] sm:$0xf]
    %v128 = vld [vmem:[#allocation5 + $0x7c] sm:$0xf]
    %v129 = vld [vmem:[#allocation5 + $0x80] sm:$0xf]
    %v130 = vld [vmem:[#allocation5 + $0x84] sm:$0xf]
    %v131 = vld [vmem:[#allocation5 + $0x88] sm:$0xf]
    %v132 = vld [vmem:[#allocation5 + $0x8c] sm:$0xf]
    %v133 = vld [vmem:[#allocation5 + $0x90] sm:$0xf]
    %v134 = vld [vmem:[#allocation5 + $0x94] sm:$0xf]
    %v135 = vld [vmem:[#allocation5 + $0x98] sm:$0xf]
    %v136 = vld [vmem:[#allocation5 + $0x9c] sm:$0xf]
    %v137 = vld [vmem:[#allocation5 + $0xa0] sm:$0xf]
    %v138 = vld [vmem:[#allocation5 + $0xa4] sm:$0xf]
    %v139 = vld [vmem:[#allocation5 + $0xa8] sm:$0xf]
    %v140 = vld [vmem:[#allocation5 + $0xac] sm:$0xf]
    %v141 = vld [vmem:[#allocation5 + $0xb0] sm:$0xf]
    %v142 = vld [vmem:[#allocation5 + $0xb4] sm:$0xf]
    %v143 = vld [vmem:[#allocation5 + $0xb8] sm:$0xf]
    %v144 = vld [vmem:[#allocation5 + $0xbc] sm:$0xf]
    %v145 = vld [vmem:[#allocation5 + $0xc0] sm:$0xf]
    %v146 = vld [vmem:[#allocation5 + $0xc4] sm:$0xf]
    %v147 = vld [vmem:[#allocation5 + $0xc8] sm:$0xf]
    %v148 = vld [vmem:[#allocation5 + $0xcc] sm:$0xf]
    %v149 = vld [vmem:[#allocation5 + $0xd0] sm:$0xf]
    %v150 = vld [vmem:[#allocation5 + $0xd4] sm:$0xf]
    %v151 = vld [vmem:[#allocation5 + $0xd8] sm:$0xf]
    %v152 = vld [vmem:[#allocation5 + $0xdc] sm:$0xf]
    %v153 = vld [vmem:[#allocation5 + $0xe0] sm:$0xf]
    %v154 = vld [vmem:[#allocation5 + $0xe4] sm:$0xf]
    %v155 = vld [vmem:[#allocation5 + $0xe8] sm:$0xf]
    %v156 = vld [vmem:[#allocation5 + $0xec] sm:$0xf]
    %v157 = vld [vmem:[#allocation5 + $0xf0] sm:$0xf]
    %v158 = vld [vmem:[#allocation5 + $0xf4] sm:$0xf]
    %v159 = vld [vmem:[#allocation5 + $0xf8] sm:$0xf]
    %v160 = vld [vmem:[#allocation5 + $0xfc] sm:$0xf]
    %v161 = vld [vmem:[#allocation5 + $0x100] sm:$0xf]
    %v162 = vld [vmem:[#allocation5 + $0x104] sm:$0xf]
    %v163 = vld [vmem:[#allocation5 + $0x108] sm:$0xf]
    %v164 = vld [vmem:[#allocation5 + $0x10c] sm:$0xf]
    %v165 = vld [vmem:[#allocation5 + $0x110] sm:$0xf]
    %v166 = vld [vmem:[#allocation5 + $0x114] sm:$0xf]
    %v167 = vld [vmem:[#allocation5 + $0x118] sm:$0xf]
    %v168 = vld [vmem:[#allocation5 + $0x11c] sm:$0xf]
    %v169 = vld [vmem:[#allocation5 + $0x120] sm:$0xf]
    %v170 = vld [vmem:[#allocation5 + $0x124] sm:$0xf]
    %v171 = vld [vmem:[#allocation5 + $0x128] sm:$0xf]
    %v172 = vld [vmem:[#allocation5 + $0x12c] sm:$0xf]
    %v173 = vld [vmem:[#allocation5 + $0x130] sm:$0xf]
    %v174 = vld [vmem:[#allocation5 + $0x134] sm:$0xf]
    %v175 = vld [vmem:[#allocation5 + $0x138] sm:$0xf]
    %v176 = vld [vmem:[#allocation5 + $0x13c] sm:$0xf]
    %v177 = vld [vmem:[#allocation5 + $0x140] sm:$0xf]
    %v178 = vld [vmem:[#allocation5 + $0x144] sm:$0xf]
    %v179 = vld [vmem:[#allocation5 + $0x148] sm:$0xf]
    %v180 = vld [vmem:[#allocation5 + $0x14c] sm:$0xf]
    %v181 = vld [vmem:[#allocation5 + $0x150] sm:$0xf]
    %v182 = vld [vmem:[#allocation5 + $0x154] sm:$0xf]
    %v183 = vld [vmem:[#allocation5 + $0x158] sm:$0xf]
    %v184 = vld [vmem:[#allocation5 + $0x15c] sm:$0xf]
    %v185 = vld [vmem:[#allocation5 + $0x160] sm:$0xf]
    %v186 = vld [vmem:[#allocation5 + $0x164] sm:$0xf]
    %v187 = vld [vmem:[#allocation5 + $0x168] sm:$0xf]
    %v188 = vld [vmem:[#allocation5 + $0x16c] sm:$0xf]
    %v189 = vld [vmem:[#allocation5 + $0x170] sm:$0xf]
    %v190 = vld [vmem:[#allocation5 + $0x174] sm:$0xf]
    %v191 = vld [vmem:[#allocation5 + $0x178] sm:$0xf]
    %v192 = vld [vmem:[#allocation5 + $0x17c] sm:$0xf]
    %v193 = vld [vmem:[#allocation5 + $0x180] sm:$0xf]
    %v194 = vld [vmem:[#allocation5 + $0x184] sm:$0xf]
    %v195 = vld [vmem:[#allocation5 + $0x188] sm:$0xf]
    %v196 = vld [vmem:[#allocation5 + $0x18c] sm:$0xf]
    %v197 = vld [vmem:[#allocation5 + $0x190] sm:$0xf]
    %v198 = vld [vmem:[#allocation5 + $0x194] sm:$0xf]
    %v199 = vld [vmem:[#allocation5 + $0x198] sm:$0xf]
    %v200 = vld [vmem:[#allocation5 + $0x19c] sm:$0xf]
    %v201 = vld [vmem:[#allocation5 + $0x1a0] sm:$0xf]
    %v202 = vld [vmem:[#allocation5 + $0x1a4] sm:$0xf]
    %v203 = vld [vmem:[#allocation5 + $0x1a8] sm:$0xf]
    %v204 = vld [vmem:[#allocation5 + $0x1ac] sm:$0xf]
    %v205 = vld [vmem:[#allocation5 + $0x1b0] sm:$0xf]
    %v206 = vld [vmem:[#allocation5 + $0x1b4] sm:$0xf]
    %v207 = vld [vmem:[#allocation5 + $0x1b8] sm:$0xf]
    %v208 = vld [vmem:[#allocation5 + $0x1bc] sm:$0xf]
    %v209 = vld [vmem:[#allocation5 + $0x1c0] sm:$0xf]
    %v210 = vld [vmem:[#allocation5 + $0x1c4] sm:$0xf]
    %v211 = vld [vmem:[#allocation5 + $0x1c8] sm:$0xf]
    %v212 = vld [vmem:[#allocation5 + $0x1cc] sm:$0xf]
    %v213 = vld [vmem:[#allocation5 + $0x1d0] sm:$0xf]
    %v214 = vld [vmem:[#allocation5 + $0x1d4] sm:$0xf]
    %v215 = vld [vmem:[#allocation5 + $0x1d8] sm:$0xf]
    %v216 = vld [vmem:[#allocation5 + $0x1dc] sm:$0xf]
    %v217 = vld [vmem:[#allocation5 + $0x1e0] sm:$0xf]
    %v218 = vld [vmem:[#allocation5 + $0x1e4] sm:$0xf]
    %v219 = vld [vmem:[#allocation5 + $0x1e8] sm:$0xf]
    %v220 = vld [vmem:[#allocation5 + $0x1ec] sm:$0xf]
    %v221 = vld [vmem:[#allocation5 + $0x1f0] sm:$0xf]
    %v222 = vld [vmem:[#allocation5 + $0x1f4] sm:$0xf]
    %v223 = vld [vmem:[#allocation5 + $0x1f8] sm:$0xf]
    %v224 = vld [vmem:[#allocation5 + $0x1fc] sm:$0xf]
    %v225 = vld [vmem:[%s2] sm:$0x1]
    %v227 = vlaneseq
    %v228 = vshrl.u32 %v227, 7
    %v229 = vsub.s32 0, %v228
    %v230 = vrot.slane %v225, %v229
    %v360 = vunpack.c.l.b16 %v97
    %v361 = vunpack.c.l.b16 %v98
    %v362 = vunpack.c.l.b16 %v99
    %v363 = vunpack.c.l.b16 %v100
    %v364 = vunpack.c.l.b16 %v101
    %v365 = vunpack.c.l.b16 %v102
    %v366 = vunpack.c.l.b16 %v103
    %v367 = vunpack.c.l.b16 %v104
    %v368 = vunpack.c.l.b16 %v105
    %v369 = vunpack.c.l.b16 %v106
    %v370 = vunpack.c.l.b16 %v107
    %v371 = vunpack.c.l.b16 %v108
    %v372 = vunpack.c.l.b16 %v109
    %v373 = vunpack.c.l.b16 %v110
    %v374 = vunpack.c.l.b16 %v111
    %v375 = vunpack.c.l.b16 %v112
    %v376 = vunpack.c.l.b16 %v113
    %v377 = vunpack.c.l.b16 %v114
    %v378 = vunpack.c.l.b16 %v115
    %v379 = vunpack.c.l.b16 %v116
    %v380 = vunpack.c.l.b16 %v117
    %v381 = vunpack.c.l.b16 %v118
    %v382 = vunpack.c.l.b16 %v119
    %v383 = vunpack.c.l.b16 %v120
    %v384 = vunpack.c.l.b16 %v121
    %v385 = vunpack.c.l.b16 %v122
    %v386 = vunpack.c.l.b16 %v123
    %v387 = vunpack.c.l.b16 %v124
    %v388 = vunpack.c.l.b16 %v125
    %v389 = vunpack.c.l.b16 %v126
    %v390 = vunpack.c.l.b16 %v127
    %v391 = vunpack.c.l.b16 %v128
    %v392 = vunpack.c.l.b16 %v129
    %v393 = vunpack.c.l.b16 %v130
    %v394 = vunpack.c.l.b16 %v131
    %v395 = vunpack.c.l.b16 %v132
    %v396 = vunpack.c.l.b16 %v133
    %v397 = vunpack.c.l.b16 %v134
    %v398 = vunpack.c.l.b16 %v135
    %v399 = vunpack.c.l.b16 %v136
    %v400 = vunpack.c.l.b16 %v137
    %v401 = vunpack.c.l.b16 %v138
    %v402 = vunpack.c.l.b16 %v139
    %v403 = vunpack.c.l.b16 %v140
    %v404 = vunpack.c.l.b16 %v141
    %v405 = vunpack.c.l.b16 %v142
    %v406 = vunpack.c.l.b16 %v143
    %v407 = vunpack.c.l.b16 %v144
    %v408 = vunpack.c.l.b16 %v145
    %v409 = vunpack.c.l.b16 %v146
    %v410 = vunpack.c.l.b16 %v147
    %v411 = vunpack.c.l.b16 %v148
    %v412 = vunpack.c.l.b16 %v149
    %v413 = vunpack.c.l.b16 %v150
    %v414 = vunpack.c.l.b16 %v151
    %v415 = vunpack.c.l.b16 %v152
    %v416 = vunpack.c.l.b16 %v153
    %v417 = vunpack.c.l.b16 %v154
    %v418 = vunpack.c.l.b16 %v155
    %v419 = vunpack.c.l.b16 %v156
    %v420 = vunpack.c.l.b16 %v157
    %v421 = vunpack.c.l.b16 %v158
    %v422 = vunpack.c.l.b16 %v159
    %v423 = vunpack.c.l.b16 %v160
    %v424 = vunpack.c.l.b16 %v161
    %v425 = vunpack.c.l.b16 %v162
    %v426 = vunpack.c.l.b16 %v163
    %v427 = vunpack.c.l.b16 %v164
    %v428 = vunpack.c.l.b16 %v165
    %v429 = vunpack.c.l.b16 %v166
    %v430 = vunpack.c.l.b16 %v167
    %v431 = vunpack.c.l.b16 %v168
    %v432 = vunpack.c.l.b16 %v169
    %v433 = vunpack.c.l.b16 %v170
    %v434 = vunpack.c.l.b16 %v171
    %v435 = vunpack.c.l.b16 %v172
    %v436 = vunpack.c.l.b16 %v173
    %v437 = vunpack.c.l.b16 %v174
    %v438 = vunpack.c.l.b16 %v175
    %v439 = vunpack.c.l.b16 %v176
    %v440 = vunpack.c.l.b16 %v177
    %v441 = vunpack.c.l.b16 %v178
    %v442 = vunpack.c.l.b16 %v179
    %v443 = vunpack.c.l.b16 %v180
    %v444 = vunpack.c.l.b16 %v181
    %v445 = vunpack.c.l.b16 %v182
    %v446 = vunpack.c.l.b16 %v183
    %v447 = vunpack.c.l.b16 %v184
    %v448 = vunpack.c.l.b16 %v185
    %v449 = vunpack.c.l.b16 %v186
    %v450 = vunpack.c.l.b16 %v187
    %v451 = vunpack.c.l.b16 %v188
    %v452 = vunpack.c.l.b16 %v189
    %v453 = vunpack.c.l.b16 %v190
    %v454 = vunpack.c.l.b16 %v191
    %v455 = vunpack.c.l.b16 %v192
    %v456 = vunpack.c.l.b16 %v193
    %v457 = vunpack.c.l.b16 %v194
    %v458 = vunpack.c.l.b16 %v195
    %v459 = vunpack.c.l.b16 %v196
    %v460 = vunpack.c.l.b16 %v197
    %v461 = vunpack.c.l.b16 %v198
    %v462 = vunpack.c.l.b16 %v199
    %v463 = vunpack.c.l.b16 %v200
    %v464 = vunpack.c.l.b16 %v201
    %v465 = vunpack.c.l.b16 %v202
    %v466 = vunpack.c.l.b16 %v203
    %v467 = vunpack.c.l.b16 %v204
    %v468 = vunpack.c.l.b16 %v205
    %v469 = vunpack.c.l.b16 %v206
    %v470 = vunpack.c.l.b16 %v207
    %v471 = vunpack.c.l.b16 %v208
    %v472 = vunpack.c.l.b16 %v209
    %v473 = vunpack.c.l.b16 %v210
    %v474 = vunpack.c.l.b16 %v211
    %v475 = vunpack.c.l.b16 %v212
    %v476 = vunpack.c.l.b16 %v213
    %v477 = vunpack.c.l.b16 %v214
    %v478 = vunpack.c.l.b16 %v215
    %v479 = vunpack.c.l.b16 %v216
    %v480 = vunpack.c.l.b16 %v217
    %v481 = vunpack.c.l.b16 %v218
    %v482 = vunpack.c.l.b16 %v219
    %v483 = vunpack.c.l.b16 %v220
    %v484 = vunpack.c.l.b16 %v221
    %v485 = vunpack.c.l.b16 %v222
    %v486 = vunpack.c.l.b16 %v223
    %v487 = vunpack.c.l.b16 %v224
    %v488 = vpack.c.b16 %v361, %v360
    %v489 = vpack.c.b16 %v363, %v362
    %v490 = vpack.c.b16 %v365, %v364
    %v491 = vpack.c.b16 %v367, %v366
    %v492 = vpack.c.b16 %v369, %v368
    %v493 = vpack.c.b16 %v371, %v370
    %v494 = vpack.c.b16 %v373, %v372
    %v495 = vpack.c.b16 %v375, %v374
    %v496 = vpack.c.b16 %v377, %v376
    %v497 = vpack.c.b16 %v379, %v378
    %v498 = vpack.c.b16 %v381, %v380
    %v499 = vpack.c.b16 %v383, %v382
    %v500 = vpack.c.b16 %v385, %v384
    %v501 = vpack.c.b16 %v387, %v386
    %v502 = vpack.c.b16 %v389, %v388
    %v503 = vpack.c.b16 %v391, %v390
    %v504 = vpack.c.b16 %v393, %v392
    %v505 = vpack.c.b16 %v395, %v394
    %v506 = vpack.c.b16 %v397, %v396
    %v507 = vpack.c.b16 %v399, %v398
    %v508 = vpack.c.b16 %v401, %v400
    %v509 = vpack.c.b16 %v403, %v402
    %v510 = vpack.c.b16 %v405, %v404
    %v511 = vpack.c.b16 %v407, %v406
    %v512 = vpack.c.b16 %v409, %v408
    %v513 = vpack.c.b16 %v411, %v410
    %v514 = vpack.c.b16 %v413, %v412
    %v515 = vpack.c.b16 %v415, %v414
    %v516 = vpack.c.b16 %v417, %v416
    %v517 = vpack.c.b16 %v419, %v418
    %v518 = vpack.c.b16 %v421, %v420
    %v519 = vpack.c.b16 %v423, %v422
    %v520 = vpack.c.b16 %v425, %v424
    %v521 = vpack.c.b16 %v427, %v426
    %v522 = vpack.c.b16 %v429, %v428
    %v523 = vpack.c.b16 %v431, %v430
    %v524 = vpack.c.b16 %v433, %v432
    %v525 = vpack.c.b16 %v435, %v434
    %v526 = vpack.c.b16 %v437, %v436
    %v527 = vpack.c.b16 %v439, %v438
    %v528 = vpack.c.b16 %v441, %v440
    %v529 = vpack.c.b16 %v443, %v442
    %v530 = vpack.c.b16 %v445, %v444
    %v531 = vpack.c.b16 %v447, %v446
    %v532 = vpack.c.b16 %v449, %v448
    %v533 = vpack.c.b16 %v451, %v450
    %v534 = vpack.c.b16 %v453, %v452
    %v535 = vpack.c.b16 %v455, %v454
    %v536 = vpack.c.b16 %v457, %v456
    %v537 = vpack.c.b16 %v459, %v458
    %v538 = vpack.c.b16 %v461, %v460
    %v539 = vpack.c.b16 %v463, %v462
    %v540 = vpack.c.b16 %v465, %v464
    %v541 = vpack.c.b16 %v467, %v466
    %v542 = vpack.c.b16 %v469, %v468
    %v543 = vpack.c.b16 %v471, %v470
    %v544 = vpack.c.b16 %v473, %v472
    %v545 = vpack.c.b16 %v475, %v474
    %v546 = vpack.c.b16 %v477, %v476
    %v547 = vpack.c.b16 %v479, %v478
    %v548 = vpack.c.b16 %v481, %v480
    %v549 = vpack.c.b16 %v483, %v482
    %v550 = vpack.c.b16 %v485, %v484
    %v551 = vpack.c.b16 %v487, %v486
    %616 = vmatprep.subr.bf16.mxu0 0
    %617 = vmatpush1.bf16.msra.mxu0 %v488
    %618 = vmatprep.subr.bf16.mxu0 0
    %619 = vmatpush1.bf16.msra.mxu0 %v489
    %620 = vmatprep.subr.bf16.mxu0 0
    %621 = vmatpush1.bf16.msra.mxu0 %v490
    %622 = vmatprep.subr.bf16.mxu0 0
    %623 = vmatpush1.bf16.msra.mxu0 %v491
    %624 = vmatprep.subr.bf16.mxu0 0
    %625 = vmatpush1.bf16.msra.mxu0 %v492
    %626 = vmatprep.subr.bf16.mxu0 0
    %627 = vmatpush1.bf16.msra.mxu0 %v493
    %628 = vmatprep.subr.bf16.mxu0 0
    %629 = vmatpush1.bf16.msra.mxu0 %v494
    %630 = vmatprep.subr.bf16.mxu0 0
    %631 = vmatpush1.bf16.msra.mxu0 %v495
    %632 = vmatprep.subr.bf16.mxu0 0
    %633 = vmatpush1.bf16.msra.mxu0 %v496
    %634 = vmatprep.subr.bf16.mxu0 0
    %635 = vmatpush1.bf16.msra.mxu0 %v497
    %636 = vmatprep.subr.bf16.mxu0 0
    %637 = vmatpush1.bf16.msra.mxu0 %v498
    %638 = vmatprep.subr.bf16.mxu0 0
    %639 = vmatpush1.bf16.msra.mxu0 %v499
    %640 = vmatprep.subr.bf16.mxu0 0
    %641 = vmatpush1.bf16.msra.mxu0 %v500
    %642 = vmatprep.subr.bf16.mxu0 0
    %643 = vmatpush1.bf16.msra.mxu0 %v501
    %644 = vmatprep.subr.bf16.mxu0 0
    %645 = vmatpush1.bf16.msra.mxu0 %v502
    %646 = vmatprep.subr.bf16.mxu0 0
    %647 = vmatpush1.bf16.msra.mxu0 %v503
    %648 = vmatprep.mubr.bf16.mxu0 %v90
    %649 = vmatmul.mubr.bf16.gmra.mrb[0].mxu0 %v89
    %v650 = vpop.f32.mrb[0].mxu0
    %v651 = vadd.f32 %v230, %v650
    %v652 = vpop.f32.mrb[0].mxu0
    %v653 = vpop.f32.mrb[0].mxu0
    %v654 = vpop.f32.mrb[0].mxu0
    %655 = vdwg.mxu0
    %656 = vmatprep.subr.bf16.mxu0 0
    %657 = vmatpush1.bf16.msra.mxu0 %v504
    %658 = vmatprep.subr.bf16.mxu0 0
    %659 = vmatpush1.bf16.msra.mxu0 %v505
    %660 = vmatprep.subr.bf16.mxu0 0
    %661 = vmatpush1.bf16.msra.mxu0 %v506
    %662 = vmatprep.subr.bf16.mxu0 0
    %663 = vmatpush1.bf16.msra.mxu0 %v507
    %664 = vmatprep.subr.bf16.mxu0 0
    %665 = vmatpush1.bf16.msra.mxu0 %v508
    %666 = vmatprep.subr.bf16.mxu0 0
    %667 = vmatpush1.bf16.msra.mxu0 %v509
    %668 = vmatprep.subr.bf16.mxu0 0
    %669 = vmatpush1.bf16.msra.mxu0 %v510
    %670 = vmatprep.subr.bf16.mxu0 0
    %671 = vmatpush1.bf16.msra.mxu0 %v511
    %672 = vmatprep.subr.bf16.mxu0 0
    %673 = vmatpush1.bf16.msra.mxu0 %v512
    %674 = vmatprep.subr.bf16.mxu0 0
    %675 = vmatpush1.bf16.msra.mxu0 %v513
    %676 = vmatprep.subr.bf16.mxu0 0
    %677 = vmatpush1.bf16.msra.mxu0 %v514
    %678 = vmatprep.subr.bf16.mxu0 0
    %679 = vmatpush1.bf16.msra.mxu0 %v515
    %680 = vmatprep.subr.bf16.mxu0 0
    %681 = vmatpush1.bf16.msra.mxu0 %v516
    %682 = vmatprep.subr.bf16.mxu0 0
    %683 = vmatpush1.bf16.msra.mxu0 %v517
    %684 = vmatprep.subr.bf16.mxu0 0
    %685 = vmatpush1.bf16.msra.mxu0 %v518
    %686 = vmatprep.subr.bf16.mxu0 0
    %687 = vmatpush1.bf16.msra.mxu0 %v519
    %688 = vmatprep.mubr.bf16.mxu0 %v92
    %689 = vmatmul.mubr.bf16.gmra.mrb[0].mxu0 %v91
    %v690 = vpop.f32.mrb[0].mxu0
    %v691 = vadd.f32 %v651, %v690
    %v692 = vpop.f32.mrb[0].mxu0
    %v693 = vpop.f32.mrb[0].mxu0
    %v694 = vpop.f32.mrb[0].mxu0
    %695 = vdwg.mxu0
    %696 = vmatprep.subr.bf16.mxu0 0
    %697 = vmatpush1.bf16.msra.mxu0 %v520
    %698 = vmatprep.subr.bf16.mxu0 0
    %699 = vmatpush1.bf16.msra.mxu0 %v521
    %700 = vmatprep.subr.bf16.mxu0 0
    %701 = vmatpush1.bf16.msra.mxu0 %v522
    %702 = vmatprep.subr.bf16.mxu0 0
    %703 = vmatpush1.bf16.msra.mxu0 %v523
    %704 = vmatprep.subr.bf16.mxu0 0
    %705 = vmatpush1.bf16.msra.mxu0 %v524
    %706 = vmatprep.subr.bf16.mxu0 0
    %707 = vmatpush1.bf16.msra.mxu0 %v525
    %708 = vmatprep.subr.bf16.mxu0 0
    %709 = vmatpush1.bf16.msra.mxu0 %v526
    %710 = vmatprep.subr.bf16.mxu0 0
    %711 = vmatpush1.bf16.msra.mxu0 %v527
    %712 = vmatprep.subr.bf16.mxu0 0
    %713 = vmatpush1.bf16.msra.mxu0 %v528
    %714 = vmatprep.subr.bf16.mxu0 0
    %715 = vmatpush1.bf16.msra.mxu0 %v529
    %716 = vmatprep.subr.bf16.mxu0 0
    %717 = vmatpush1.bf16.msra.mxu0 %v530
    %718 = vmatprep.subr.bf16.mxu0 0
    %719 = vmatpush1.bf16.msra.mxu0 %v531
    %720 = vmatprep.subr.bf16.mxu0 0
    %721 = vmatpush1.bf16.msra.mxu0 %v532
    %722 = vmatprep.subr.bf16.mxu0 0
    %723 = vmatpush1.bf16.msra.mxu0 %v533
    %724 = vmatprep.subr.bf16.mxu0 0
    %725 = vmatpush1.bf16.msra.mxu0 %v534
    %726 = vmatprep.subr.bf16.mxu0 0
    %727 = vmatpush1.bf16.msra.mxu0 %v535
    %728 = vmatprep.mubr.bf16.mxu0 %v94
    %729 = vmatmul.mubr.bf16.gmra.mrb[0].mxu0 %v93
    %v730 = vpop.f32.mrb[0].mxu0
    %v731 = vadd.f32 %v691, %v730
    %v732 = vpop.f32.mrb[0].mxu0
    %v733 = vpop.f32.mrb[0].mxu0
    %v734 = vpop.f32.mrb[0].mxu0
    %735 = vdwg.mxu0
    %736 = vmatprep.subr.bf16.mxu0 0
    %737 = vmatpush1.bf16.msra.mxu0 %v536
    %738 = vmatprep.subr.bf16.mxu0 0
    %739 = vmatpush1.bf16.msra.mxu0 %v537
    %740 = vmatprep.subr.bf16.mxu0 0
    %741 = vmatpush1.bf16.msra.mxu0 %v538
    %742 = vmatprep.subr.bf16.mxu0 0
    %743 = vmatpush1.bf16.msra.mxu0 %v539
    %744 = vmatprep.subr.bf16.mxu0 0
    %745 = vmatpush1.bf16.msra.mxu0 %v540
    %746 = vmatprep.subr.bf16.mxu0 0
    %747 = vmatpush1.bf16.msra.mxu0 %v541
    %748 = vmatprep.subr.bf16.mxu0 0
    %749 = vmatpush1.bf16.msra.mxu0 %v542
    %750 = vmatprep.subr.bf16.mxu0 0
    %751 = vmatpush1.bf16.msra.mxu0 %v543
    %752 = vmatprep.subr.bf16.mxu0 0
    %753 = vmatpush1.bf16.msra.mxu0 %v544
    %754 = vmatprep.subr.bf16.mxu0 0
    %755 = vmatpush1.bf16.msra.mxu0 %v545
    %756 = vmatprep.subr.bf16.mxu0 0
    %757 = vmatpush1.bf16.msra.mxu0 %v546
    %758 = vmatprep.subr.bf16.mxu0 0
    %759 = vmatpush1.bf16.msra.mxu0 %v547
    %760 = vmatprep.subr.bf16.mxu0 0
    %761 = vmatpush1.bf16.msra.mxu0 %v548
    %762 = vmatprep.subr.bf16.mxu0 0
    %763 = vmatpush1.bf16.msra.mxu0 %v549
    %764 = vmatprep.subr.bf16.mxu0 0
    %765 = vmatpush1.bf16.msra.mxu0 %v550
    %766 = vmatprep.subr.bf16.mxu0 0
    %767 = vmatpush1.bf16.msra.mxu0 %v551
    %768 = vmatprep.mubr.bf16.mxu0 %v96
    %769 = vmatmul.mubr.bf16.gmra.mrb[0].mxu0 %v95
    %v770 = vpop.f32.mrb[0].mxu0
    %v771 = vadd.f32 %v731, %v770
    %v772 = vpop.f32.mrb[0].mxu0
    %v773 = vpop.f32.mrb[0].mxu0
    %v774 = vpop.f32.mrb[0].mxu0
    %775 = vdwg.mxu0
    %v776 = vmax.f32 %v771, 0.0
    %v777 = vpack.c.bf16 %v776, %v776
    %v778 = vld [vmem:[#allocation7] sm:$0xf]
    %v779 = vld [vmem:[#allocation7 + $0x4] sm:$0xf]
    %v780 = vld [vmem:[#allocation7 + $0x8] sm:$0xf]
    %v781 = vld [vmem:[#allocation7 + $0xc] sm:$0xf]
    %v782 = vld [vmem:[#allocation7 + $0x10] sm:$0xf]
    %v783 = vld [vmem:[#allocation7 + $0x14] sm:$0xf]
    %v784 = vld [vmem:[#allocation7 + $0x18] sm:$0xf]
    %v785 = vld [vmem:[#allocation7 + $0x1c] sm:$0xf]
    %v786 = vld [vmem:[#allocation7 + $0x20] sm:$0xf]
    %v787 = vld [vmem:[#allocation7 + $0x24] sm:$0xf]
    %v788 = vld [vmem:[#allocation7 + $0x28] sm:$0xf]
    %v789 = vld [vmem:[#allocation7 + $0x2c] sm:$0xf]
    %v790 = vld [vmem:[#allocation7 + $0x30] sm:$0xf]
    %v791 = vld [vmem:[#allocation7 + $0x34] sm:$0xf]
    %v792 = vld [vmem:[#allocation7 + $0x38] sm:$0xf]
    %v793 = vld [vmem:[#allocation7 + $0x3c] sm:$0xf]
    %v794 = vld [vmem:[%s4] sm:$0x1]
    %v796 = vlaneseq
    %v797 = vshrl.u32 %v796, 7
    %v798 = vsub.s32 0, %v797
    %v799 = vrot.slane %v794, %v798
    %v817 = vunpack.c.l.b16 %v778
    %v818 = vunpack.c.l.b16 %v779
    %v819 = vunpack.c.l.b16 %v780
    %v820 = vunpack.c.l.b16 %v781
    %v821 = vunpack.c.l.b16 %v782
    %v822 = vunpack.c.l.b16 %v783
    %v823 = vunpack.c.l.b16 %v784
    %v824 = vunpack.c.l.b16 %v785
    %v825 = vunpack.c.l.b16 %v786
    %v826 = vunpack.c.l.b16 %v787
    %v827 = vunpack.c.l.b16 %v788
    %v828 = vunpack.c.l.b16 %v789
    %v829 = vunpack.c.l.b16 %v790
    %v830 = vunpack.c.l.b16 %v791
    %v831 = vunpack.c.l.b16 %v792
    %v832 = vunpack.c.l.b16 %v793
    %v833 = vpack.c.b16 %v818, %v817
    %v834 = vpack.c.b16 %v820, %v819
    %v835 = vpack.c.b16 %v822, %v821
    %v836 = vpack.c.b16 %v824, %v823
    %v837 = vpack.c.b16 %v826, %v825
    %v838 = vpack.c.b16 %v828, %v827
    %v839 = vpack.c.b16 %v830, %v829
    %v840 = vpack.c.b16 %v832, %v831
    %849 = vmatprep.subr.bf16.mxu0 0
    %850 = vmatpush1.bf16.msra.mxu0 %v833
    %851 = vmatprep.subr.bf16.mxu0 0
    %852 = vmatpush1.bf16.msra.mxu0 %v834
    %853 = vmatprep.subr.bf16.mxu0 0
    %854 = vmatpush1.bf16.msra.mxu0 %v835
    %855 = vmatprep.subr.bf16.mxu0 0
    %856 = vmatpush1.bf16.msra.mxu0 %v836
    %857 = vmatprep.subr.bf16.mxu0 0
    %858 = vmatpush1.bf16.msra.mxu0 %v837
    %859 = vmatprep.subr.bf16.mxu0 0
    %860 = vmatpush1.bf16.msra.mxu0 %v838
    %861 = vmatprep.subr.bf16.mxu0 0
    %862 = vmatpush1.bf16.msra.mxu0 %v839
    %863 = vmatprep.subr.bf16.mxu0 0
    %864 = vmatpush1.bf16.msra.mxu0 %v840
    %865 = vmatprep.subr.bf16.mxu0 0
    %866 = vmatpush1.bf16.msra.mxu0 0
    %867 = vmatprep.subr.bf16.mxu0 0
    %868 = vmatpush1.bf16.msra.mxu0 0
    %869 = vmatprep.subr.bf16.mxu0 0
    %870 = vmatpush1.bf16.msra.mxu0 0
    %871 = vmatprep.subr.bf16.mxu0 0
    %872 = vmatpush1.bf16.msra.mxu0 0
    %873 = vmatprep.subr.bf16.mxu0 0
    %874 = vmatpush1.bf16.msra.mxu0 0
    %875 = vmatprep.subr.bf16.mxu0 0
    %876 = vmatpush1.bf16.msra.mxu0 0
    %877 = vmatprep.subr.bf16.mxu0 0
    %878 = vmatpush1.bf16.msra.mxu0 0
    %879 = vmatprep.subr.bf16.mxu0 0
    %880 = vmatpush1.bf16.msra.mxu0 0
    %881 = vmatprep.mubr.bf16.mxu0 0
    %882 = vmatmul.mubr.bf16.gmra.mrb[0].mxu0 %v777
    %v883 = vpop.f32.mrb[0].mxu0
    %v884 = vadd.f32 %v799, %v883
    %v885 = vpop.f32.mrb[0].mxu0
    %v886 = vpop.f32.mrb[0].mxu0
    %v887 = vpop.f32.mrb[0].mxu0
    %888 = vdwg.mxu0
    %v889 = vmax.f32 %v884, 0.0
    %v890 = vpack.c.bf16 %v889, %v889
    %v891 = vld [vmem:[#allocation8] sm:$0xf]
    %v892 = vld [vmem:[#allocation8 + $0x4] sm:$0xf]
    %v893 = vld [vmem:[#allocation8 + $0x8] sm:$0xf]
    %v894 = vld [vmem:[#allocation8 + $0xc] sm:$0xf]
    %v895 = vld [vmem:[#allocation8 + $0x10] sm:$0xf]
    %v896 = vld [vmem:[#allocation8 + $0x14] sm:$0xf]
    %v897 = vld [vmem:[#allocation8 + $0x18] sm:$0xf]
    %v898 = vld [vmem:[#allocation8 + $0x1c] sm:$0xf]
    %v899 = vld [vmem:[#allocation8 + $0x20] sm:$0xf]
    %v900 = vld [vmem:[#allocation8 + $0x24] sm:$0xf]
    %v901 = vld [vmem:[#allocation8 + $0x28] sm:$0xf]
    %v902 = vld [vmem:[#allocation8 + $0x2c] sm:$0xf]
    %v903 = vld [vmem:[#allocation8 + $0x30] sm:$0xf]
    %v904 = vld [vmem:[#allocation8 + $0x34] sm:$0xf]
    %v905 = vld [vmem:[#allocation8 + $0x38] sm:$0xf]
    %v906 = vld [vmem:[#allocation8 + $0x3c] sm:$0xf]
    %v907 = vld [vmem:[%s6] sm:$0x1]
    %v909 = vlaneseq
    %v910 = vshrl.u32 %v909, 7
    %v911 = vsub.s32 0, %v910
    %v912 = vrot.slane %v907, %v911
    %v930 = vunpack.c.l.b16 %v891
    %v931 = vunpack.c.l.b16 %v892
    %v932 = vunpack.c.l.b16 %v893
    %v933 = vunpack.c.l.b16 %v894
    %v934 = vunpack.c.l.b16 %v895
    %v935 = vunpack.c.l.b16 %v896
    %v936 = vunpack.c.l.b16 %v897
    %v937 = vunpack.c.l.b16 %v898
    %v938 = vunpack.c.l.b16 %v899
    %v939 = vunpack.c.l.b16 %v900
    %v940 = vunpack.c.l.b16 %v901
    %v941 = vunpack.c.l.b16 %v902
    %v942 = vunpack.c.l.b16 %v903
    %v943 = vunpack.c.l.b16 %v904
    %v944 = vunpack.c.l.b16 %v905
    %v945 = vunpack.c.l.b16 %v906
    %v946 = vpack.c.b16 %v931, %v930
    %v947 = vpack.c.b16 %v933, %v932
    %v948 = vpack.c.b16 %v935, %v934
    %v949 = vpack.c.b16 %v937, %v936
    %v950 = vpack.c.b16 %v939, %v938
    %v951 = vpack.c.b16 %v941, %v940
    %v952 = vpack.c.b16 %v943, %v942
    %v953 = vpack.c.b16 %v945, %v944
    %962 = vmatprep.subr.bf16.mxu0 0
    %963 = vmatpush1.bf16.msra.mxu0 %v946
    %964 = vmatprep.subr.bf16.mxu0 0
    %965 = vmatpush1.bf16.msra.mxu0 %v947
    %966 = vmatprep.subr.bf16.mxu0 0
    %967 = vmatpush1.bf16.msra.mxu0 %v948
    %968 = vmatprep.subr.bf16.mxu0 0
    %969 = vmatpush1.bf16.msra.mxu0 %v949
    %970 = vmatprep.subr.bf16.mxu0 0
    %971 = vmatpush1.bf16.msra.mxu0 %v950
    %972 = vmatprep.subr.bf16.mxu0 0
    %973 = vmatpush1.bf16.msra.mxu0 %v951
    %974 = vmatprep.subr.bf16.mxu0 0
    %975 = vmatpush1.bf16.msra.mxu0 %v952
    %976 = vmatprep.subr.bf16.mxu0 0
    %977 = vmatpush1.bf16.msra.mxu0 %v953
    %978 = vmatprep.subr.bf16.mxu0 0
    %979 = vmatpush1.bf16.msra.mxu0 0
    %980 = vmatprep.subr.bf16.mxu0 0
    %981 = vmatpush1.bf16.msra.mxu0 0
    %982 = vmatprep.subr.bf16.mxu0 0
    %983 = vmatpush1.bf16.msra.mxu0 0
    %984 = vmatprep.subr.bf16.mxu0 0
    %985 = vmatpush1.bf16.msra.mxu0 0
    %986 = vmatprep.subr.bf16.mxu0 0
    %987 = vmatpush1.bf16.msra.mxu0 0
    %988 = vmatprep.subr.bf16.mxu0 0
    %989 = vmatpush1.bf16.msra.mxu0 0
    %990 = vmatprep.subr.bf16.mxu0 0
    %991 = vmatpush1.bf16.msra.mxu0 0
    %992 = vmatprep.subr.bf16.mxu0 0
    %993 = vmatpush1.bf16.msra.mxu0 0
    %994 = vmatprep.mubr.bf16.mxu0 0
    %995 = vmatmul.mubr.bf16.gmra.mrb[0].mxu0 %v890
    %v996 = vpop.f32.mrb[0].mxu0
    %v997 = vadd.f32 %v912, %v996
    %v998 = vpop.f32.mrb[0].mxu0
    %v999 = vpop.f32.mrb[0].mxu0
    %v1000 = vpop.f32.mrb[0].mxu0
    %1001 = vdwg.mxu0
    %v1002 = vmax.f32 %v997, 0.0
    %v1003 = vand.u32 2147483647, %v997
    %v1004 = vsub.f32 0.0, %v1003
    %v1005 = vmul.f32 %v1004, 1.442695
    %v1006 = vpow.pop %v1005
    %v1007 = vadd.f32 %v1006, 1.0
    %v1008 = vlog2.pop %v1007
    %v1009 = vmul.f32 %v1008, 0.6931472
    %v1010 = vmul.f32 -0.5, %v1006
    %v1011 = vadd.f32 %v1010, 1.0
    %v1012 = vmul.f32 %v1011, %v1006
    %v1013 = vand.u32 2147483647, %v1006
    %vm1014 = vcmp.lt.f32.partialorder %v1013, 0.0004427343
    %v1015 = vsel %vm1014, %v1012, %v1009
    %v1016 = vadd.f32 %v1002, %v1015
    %v1017 = vadd.f32 %v1016, 1e-05
    %v1018 = vlaneseq
    %v1019 = vand.u32 %v1018, 127
    %vm1020 = vcmp.ge.s32.totalorder %v1019, 8
    %vm1021 = vcmp.lt.s32.totalorder %v1019, 16
    %vm1022 = vmand %vm1020, %vm1021
    %v1023 = vsel %vm1022, 1, 0
    %vm1024 = vcmp.eq.s32.totalorder %v1023, 1
    %v1025 = vsel %vm1024, %v1017, %v997
    %1026 = vst [vmem:[#allocation10] sm:$0xff] %v1025
    // Predicated region
    $region46: #{tpu_custom_call.1} parent=1 // pred_check
      _
    $region47: #{tpu_custom_call.1} parent=1 // pred_check_branch
      %1028 = sbr.rel (0) target = $region49
    $region48: #{tpu_custom_call.1} parent=1 // pred_region
      %s1030 = ssub.s32 128, 128
      %1031 = vsyncadd [#allocation4], %s1030
      %s1033 = sshll.u32 [#allocation10], 4
      %s1034 = int_to_ptr.vmem [resolvable:$true] %s1033
      %1036 = dma.vmem_to_hbm [thread:$0]  %s1034, 128, %s7, [#allocation4]
    $region49: #{tpu_custom_call.1} parent=1 // pred_fallthru
      _
    // Predicated region
    $region50: #{tpu_custom_call.1} parent=1 // pred_check
      _
    $region51: #{tpu_custom_call.1} parent=1 // pred_check_branch
      %1038 = sbr.rel (0) target = $region53
    $region52: #{tpu_custom_call.1} parent=1 // pred_region
      %1039 = dma.done [#allocation4], 128
    $region53: #{tpu_custom_call.1} parent=1 // pred_fallthru
      _
    %1040 = vsyncpa [#allocation3], 1
    %1041 = vsyncpa [#allocation6], 1
    %1042 = vsyncpa [#allocation9], 1
    %1043 = vsyncpa [#allocation4], 1

</llo_original>
